<compile_context>
chip_gen: v7x
topology: tpu7x:2x2x1
jax: 0.10.0
libtpu: 0.0.40
codegen_flags: <defaults>
</compile_context>

<pallas_src>
import functools
import math

import jax
import jax.numpy as jnp
from jax.experimental import pallas as pl
from jax.experimental.pallas import tpu as pltpu


def _erf_f32(x):
    # Abramowitz & Stegun 7.1.26 rational approximation (max abs err ~1.5e-7),
    # built only from ops with guaranteed Mosaic lowerings (mul/add/div/exp/abs/where).
    p = 0.3275911
    a1, a2, a3, a4, a5 = 0.254829592, -0.284496736, 1.421413741, -1.453152027, 1.061405429
    ax = jnp.abs(x)
    t = 1.0 / (1.0 + p * ax)
    poly = ((((a5 * t + a4) * t + a3) * t + a2) * t + a1) * t
    y = 1.0 - poly * jnp.exp(-ax * ax)
    return jnp.where(x >= 0, y, -y)


def _gelu_exact(x):
    # PyTorch nn.GELU() default (erf form).
    return 0.5 * x * (1.0 + _erf_f32(x * (1.0 / math.sqrt(2.0))))


def _nblock_kernel(x_ref, wk_ref, cb_ref, g_ref, b_ref, o_ref, ypad_ref, *,
                   ksize, dilation, eps):
    C = x_ref.shape[1]
    L = x_ref.shape[2]
    pad = (ksize // 2) * dilation

    x = x_ref[0].astype(jnp.float32)                       # (C, L)

    # ---- LayerNorm over the channel axis (per sequence position) ----
    mean = jnp.mean(x, axis=0, keepdims=True)              # (1, L)
    cen = x - mean
    var = jnp.mean(cen * cen, axis=0, keepdims=True)       # biased var (matches PyTorch LN)
    y = cen * jax.lax.rsqrt(var + eps)                     # (C, L)
    y = y * g_ref[...] + b_ref[...]                        # (C,1) params broadcast over lanes

    # ---- zero-padded staging buffer so every conv tap is an in-bounds read ----
    ypad_ref[...] = jnp.zeros(ypad_ref.shape, ypad_ref.dtype)
    ypad_ref[:, pad:pad + L] = y

    # ---- Conv1d(dim, dim, k=9, dilation, "same" padding) as 9 MXU matmuls ----
    acc = jnp.zeros((C, L), dtype=jnp.float32)
    for k in range(ksize):                                 # static unroll (9 taps)
        off = k * dilation
        acc = acc + jnp.dot(wk_ref[k], ypad_ref[:, off:off + L],
                            preferred_element_type=jnp.float32)
    acc = acc + cb_ref[...]                                # conv bias (C,1)

    # ---- exact GELU + residual (drop_path=0.0 -> identity) ----
    out = x + _gelu_exact(acc)
    o_ref[0] = out.astype(o_ref.dtype)


def nblock_forward(x, conv_w, conv_b, ln_w, ln_b, *, i=0, eps=1e-5):
    """Forward of NBlock: out = x + GELU(Conv1d(LayerNorm_channels(x))).

    x:      (B, C, L)        conv_w: (C, C, K) (PyTorch OIH layout)
    conv_b: (C,)             ln_w, ln_b: (C,)
    i selects the stage: dilation = 1 if i == 0 else 4**(i-1), padding = 4*dilation.
    """
    B, C, L = x.shape
    K = conv_w.shape[-1]
    assert conv_w.shape == (C, C, K) and conv_b.shape == (C,)
    assert ln_w.shape == (C,) and ln_b.shape == (C,)
    dilation = 1 if i == 0 else 4 ** (i - 1)
    pad = (K // 2) * dilation

    # Per-tap weight matrices, contraction (Cin) on the lane axis.
    w_taps = jnp.transpose(conv_w, (2, 0, 1)).astype(jnp.float32)     # (K, Cout, Cin)
    cb = conv_b.reshape(C, 1).astype(jnp.float32)
    g = ln_w.reshape(C, 1).astype(jnp.float32)
    b = ln_b.reshape(C, 1).astype(jnp.float32)

    kernel = functools.partial(_nblock_kernel, ksize=K, dilation=dilation, eps=eps)

    itemsize = jnp.dtype(x.dtype).itemsize
    cost = pl.CostEstimate(
        flops=int(B * (2 * C * C * K * L + 10 * C * L)),
        transcendentals=int(B * C * L),
        bytes_accessed=int(2 * B * C * L * itemsize + (C * C * K + 3 * C) * 4),
    )

    return pl.pallas_call(
        kernel,
        out_shape=jax.ShapeDtypeStruct((B, C, L), x.dtype),
        grid_spec=pltpu.PrefetchScalarGridSpec(
            num_scalar_prefetch=0,
            grid=(B,),                                        # one sequence per grid step
            in_specs=[
                pl.BlockSpec((1, C, L), lambda bb: (bb, 0, 0)),       # activations
                pl.BlockSpec((K, C, C), lambda bb: (0, 0, 0)),        # conv taps (constant block)
                pl.BlockSpec((C, 1), lambda bb: (0, 0)),              # conv bias
                pl.BlockSpec((C, 1), lambda bb: (0, 0)),              # LN weight
                pl.BlockSpec((C, 1), lambda bb: (0, 0)),              # LN bias
            ],
            out_specs=pl.BlockSpec((1, C, L), lambda bb: (bb, 0, 0)),
            scratch_shapes=[pltpu.VMEM((C, L + 2 * pad), jnp.float32)],
        ),
        compiler_params=pltpu.CompilerParams(
            dimension_semantics=("parallel",),                # shard batch across TCs (v7x)
        ),
        cost_estimate=cost,
    )(x, w_taps, cb, g, b)


def nblock_reference(x, conv_w, conv_b, ln_w, ln_b, *, i=0, eps=1e-5):
    """Pure-JAX reference matching the PyTorch NBlock.forward semantics."""
    dilation = 1 if i == 0 else 4 ** (i - 1)
    K = conv_w.shape[-1]
    pad = (K // 2) * dilation
    xt = jnp.transpose(x, (0, 2, 1))                          # (B, L, C)
    mean = jnp.mean(xt, axis=-1, keepdims=True)
    var = jnp.mean((xt - mean) ** 2, axis=-1, keepdims=True)
    y = (xt - mean) / jnp.sqrt(var + eps) * ln_w + ln_b
    y = jnp.transpose(y, (0, 2, 1))                           # (B, C, L)
    z = jax.lax.conv_general_dilated(
        y, conv_w, window_strides=(1,), padding=[(pad, pad)],
        rhs_dilation=(dilation,), dimension_numbers=("NCH", "OIH", "NCH"))
    z = z + conv_b[None, :, None]
    z = jax.nn.gelu(z, approximate=False)
    return x + z


if __name__ == "__main__":
    key = jax.random.PRNGKey(0)
    B, dim, L, K = 2, 32, 16, 9                               # batch=2, channels(dim)=32, seq=16

    kx, kw, kb, kg, kbeta = jax.random.split(key, 5)
    x = jax.random.normal(kx, (B, dim, L), dtype=jnp.float32)
    bound = 1.0 / math.sqrt(dim * K)
    conv_w = jax.random.uniform(kw, (dim, dim, K), jnp.float32, -bound, bound)
    conv_b = jax.random.uniform(kb, (dim,), jnp.float32, -bound, bound)
    ln_w = jnp.ones((dim,), jnp.float32) + 0.05 * jax.random.normal(kg, (dim,), jnp.float32)
    ln_b = 0.05 * jax.random.normal(kbeta, (dim,), jnp.float32)

    # Stage i=0: dilation 1, padding 4.
    out = jax.block_until_ready(nblock_forward(x, conv_w, conv_b, ln_w, ln_b, i=0))
    ref = nblock_reference(x, conv_w, conv_b, ln_w, ln_b, i=0)
    assert out.shape == ref.shape and out.dtype == ref.dtype
    assert jnp.allclose(out, ref, atol=1e-4, rtol=1e-4), float(jnp.max(jnp.abs(out - ref)))

    # Dilated stage i=2: dilation 4, padding 16 (exercises the halo/dilation path).
    out2 = jax.block_until_ready(nblock_forward(x, conv_w, conv_b, ln_w, ln_b, i=2))
    ref2 = nblock_reference(x, conv_w, conv_b, ln_w, ln_b, i=2)
    assert jnp.allclose(out2, ref2, atol=1e-4, rtol=1e-4), float(jnp.max(jnp.abs(out2 - ref2)))

    print("KERNEL_OK")
</pallas_src>

<mosaic_0001>
module attributes {stable_mosaic.version = 11 : i64} {
  func.func @_nblock_kernel(%arg0: i32, %arg1: memref<1x32x16xf32, #tpu.memory_space<vmem>>, %arg2: memref<9x32x32xf32, #tpu.memory_space<vmem>>, %arg3: memref<32x1xf32, #tpu.memory_space<vmem>>, %arg4: memref<32x1xf32, #tpu.memory_space<vmem>>, %arg5: memref<32x1xf32, #tpu.memory_space<vmem>>, %arg6: memref<1x32x16xf32, #tpu.memory_space<vmem>>, %arg7: memref<32x24xf32, #tpu.memory_space<vmem>>) attributes {dimension_semantics = [#tpu.dimension_semantics<parallel>], iteration_bounds = array<i64: 2>, scalar_prefetch = 0 : i64, scratch_operands = 1 : i64, tpu.core_type = #tpu.core_type<tc>, window_params = [{transform_indices = @transform_0, window_bounds = array<i64: 1, 32, 16>}, {pipeline_mode = #tpu.pipeline_mode<synchronous>, transform_indices = @transform_1, window_bounds = array<i64: 9, 32, 32>}, {pipeline_mode = #tpu.pipeline_mode<synchronous>, transform_indices = @transform_2, window_bounds = array<i64: 32, 1>}, {pipeline_mode = #tpu.pipeline_mode<synchronous>, transform_indices = @transform_3, window_bounds = array<i64: 32, 1>}, {pipeline_mode = #tpu.pipeline_mode<synchronous>, transform_indices = @transform_4, window_bounds = array<i64: 32, 1>}, {transform_indices = @transform_5, window_bounds = array<i64: 1, 32, 16>}]} {
    %c0 = arith.constant 0 : index
    %c0_0 = arith.constant 0 : index
    %c0_1 = arith.constant 0 : index
    %0 = vector.load %arg1[%c0, %c0_0, %c0_1] : memref<1x32x16xf32, #tpu.memory_space<vmem>>, vector<1x32x16xf32>
    %1 = vector.shape_cast %0 : vector<1x32x16xf32> to vector<32x16xf32>
    %cst = arith.constant dense<0.000000e+00> : vector<16xf32>
    %2 = vector.multi_reduction <add>, %1, %cst [0] : vector<32x16xf32> to vector<16xf32>
    %3 = vector.shape_cast %2 : vector<16xf32> to vector<1x16xf32>
    %cst_2 = arith.constant 3.200000e+01 : f32
    %4 = vector.broadcast %cst_2 : f32 to vector<1x16xf32>
    %5 = arith.divf %3, %4 : vector<1x16xf32>
    %6 = vector.broadcast %5 : vector<1x16xf32> to vector<32x16xf32>
    %7 = arith.subf %1, %6 : vector<32x16xf32>
    %8 = arith.mulf %7, %7 : vector<32x16xf32>
    %cst_3 = arith.constant dense<0.000000e+00> : vector<16xf32>
    %9 = vector.multi_reduction <add>, %8, %cst_3 [0] : vector<32x16xf32> to vector<16xf32>
    %10 = vector.shape_cast %9 : vector<16xf32> to vector<1x16xf32>
    %cst_4 = arith.constant 3.200000e+01 : f32
    %11 = vector.broadcast %cst_4 : f32 to vector<1x16xf32>
    %12 = arith.divf %10, %11 : vector<1x16xf32>
    %cst_5 = arith.constant 9.99999974E-6 : f32
    %13 = vector.broadcast %cst_5 : f32 to vector<1x16xf32>
    %14 = arith.addf %12, %13 : vector<1x16xf32>
    %15 = math.rsqrt %14 : vector<1x16xf32>
    %16 = vector.broadcast %15 : vector<1x16xf32> to vector<32x16xf32>
    %17 = arith.mulf %7, %16 : vector<32x16xf32>
    %c0_6 = arith.constant 0 : index
    %c0_7 = arith.constant 0 : index
    %18 = vector.load %arg4[%c0_6, %c0_7] : memref<32x1xf32, #tpu.memory_space<vmem>>, vector<32x1xf32>
    %19 = vector.broadcast %18 : vector<32x1xf32> to vector<32x16xf32>
    %20 = arith.mulf %17, %19 : vector<32x16xf32>
    %c0_8 = arith.constant 0 : index
    %c0_9 = arith.constant 0 : index
    %21 = vector.load %arg5[%c0_8, %c0_9] : memref<32x1xf32, #tpu.memory_space<vmem>>, vector<32x1xf32>
    %22 = vector.broadcast %21 : vector<32x1xf32> to vector<32x16xf32>
    %23 = arith.addf %20, %22 : vector<32x16xf32>
    %cst_10 = arith.constant 0.000000e+00 : f32
    %24 = vector.broadcast %cst_10 : f32 to vector<32x24xf32>
    %c0_11 = arith.constant 0 : index
    %c0_12 = arith.constant 0 : index
    %25 = vector.load %arg7[%c0_11, %c0_12] : memref<32x24xf32, #tpu.memory_space<vmem>>, vector<32x24xf32>
    tpu.vector_store %arg7[%c0_11, %c0_12], %24 {strides = array<i32>} : memref<32x24xf32, #tpu.memory_space<vmem>>, vector<32x24xf32>,
    %c0_13 = arith.constant 0 : index
    %c4 = arith.constant 4 : index
    %26 = vector.load %arg7[%c0_13, %c4] : memref<32x24xf32, #tpu.memory_space<vmem>>, vector<32x16xf32>
    tpu.vector_store %arg7[%c0_13, %c4], %23 {strides = array<i32>} : memref<32x24xf32, #tpu.memory_space<vmem>>, vector<32x16xf32>,
    %cst_14 = arith.constant 0.000000e+00 : f32
    %27 = vector.broadcast %cst_14 : f32 to vector<32x16xf32>
    %c0_15 = arith.constant 0 : index
    %c0_16 = arith.constant 0 : index
    %c0_17 = arith.constant 0 : index
    %28 = vector.load %arg2[%c0_15, %c0_16, %c0_17] : memref<9x32x32xf32, #tpu.memory_space<vmem>>, vector<1x32x32xf32>
    %29 = vector.shape_cast %28 : vector<1x32x32xf32> to vector<32x32xf32>
    %c0_18 = arith.constant 0 : index
    %c0_19 = arith.constant 0 : index
    %30 = vector.load %arg7[%c0_18, %c0_19] : memref<32x24xf32, #tpu.memory_space<vmem>>, vector<32x16xf32>
    %cst_20 = arith.constant dense<0.000000e+00> : vector<32x16xf32>
    %31 = tpu.matmul %29, %30, %cst_20 {dimension_numbers = #tpu.dot_dimension_numbers<[1], [0], [0], [1], [0, 0, 1, 1], [], []>} : vector<32x32xf32>, vector<32x16xf32>, vector<32x16xf32> -> vector<32x16xf32>
    %32 = arith.addf %27, %31 : vector<32x16xf32>
    %c1 = arith.constant 1 : index
    %c0_21 = arith.constant 0 : index
    %c0_22 = arith.constant 0 : index
    %33 = vector.load %arg2[%c1, %c0_21, %c0_22] : memref<9x32x32xf32, #tpu.memory_space<vmem>>, vector<1x32x32xf32>
    %34 = vector.shape_cast %33 : vector<1x32x32xf32> to vector<32x32xf32>
    %c0_23 = arith.constant 0 : index
    %c1_24 = arith.constant 1 : index
    %35 = vector.load %arg7[%c0_23, %c1_24] : memref<32x24xf32, #tpu.memory_space<vmem>>, vector<32x16xf32>
    %cst_25 = arith.constant dense<0.000000e+00> : vector<32x16xf32>
    %36 = tpu.matmul %34, %35, %cst_25 {dimension_numbers = #tpu.dot_dimension_numbers<[1], [0], [0], [1], [0, 0, 1, 1], [], []>} : vector<32x32xf32>, vector<32x16xf32>, vector<32x16xf32> -> vector<32x16xf32>
    %37 = arith.addf %32, %36 : vector<32x16xf32>
    %c2 = arith.constant 2 : index
    %c0_26 = arith.constant 0 : index
    %c0_27 = arith.constant 0 : index
    %38 = vector.load %arg2[%c2, %c0_26, %c0_27] : memref<9x32x32xf32, #tpu.memory_space<vmem>>, vector<1x32x32xf32>
    %39 = vector.shape_cast %38 : vector<1x32x32xf32> to vector<32x32xf32>
    %c0_28 = arith.constant 0 : index
    %c2_29 = arith.constant 2 : index
    %40 = vector.load %arg7[%c0_28, %c2_29] : memref<32x24xf32, #tpu.memory_space<vmem>>, vector<32x16xf32>
    %cst_30 = arith.constant dense<0.000000e+00> : vector<32x16xf32>
    %41 = tpu.matmul %39, %40, %cst_30 {dimension_numbers = #tpu.dot_dimension_numbers<[1], [0], [0], [1], [0, 0, 1, 1], [], []>} : vector<32x32xf32>, vector<32x16xf32>, vector<32x16xf32> -> vector<32x16xf32>
    %42 = arith.addf %37, %41 : vector<32x16xf32>
    %c3 = arith.constant 3 : index
    %c0_31 = arith.constant 0 : index
    %c0_32 = arith.constant 0 : index
    %43 = vector.load %arg2[%c3, %c0_31, %c0_32] : memref<9x32x32xf32, #tpu.memory_space<vmem>>, vector<1x32x32xf32>
    %44 = vector.shape_cast %43 : vector<1x32x32xf32> to vector<32x32xf32>
    %c0_33 = arith.constant 0 : index
    %c3_34 = arith.constant 3 : index
    %45 = vector.load %arg7[%c0_33, %c3_34] : memref<32x24xf32, #tpu.memory_space<vmem>>, vector<32x16xf32>
    %cst_35 = arith.constant dense<0.000000e+00> : vector<32x16xf32>
    %46 = tpu.matmul %44, %45, %cst_35 {dimension_numbers = #tpu.dot_dimension_numbers<[1], [0], [0], [1], [0, 0, 1, 1], [], []>} : vector<32x32xf32>, vector<32x16xf32>, vector<32x16xf32> -> vector<32x16xf32>
    %47 = arith.addf %42, %46 : vector<32x16xf32>
    %c4_36 = arith.constant 4 : index
    %c0_37 = arith.constant 0 : index
    %c0_38 = arith.constant 0 : index
    %48 = vector.load %arg2[%c4_36, %c0_37, %c0_38] : memref<9x32x32xf32, #tpu.memory_space<vmem>>, vector<1x32x32xf32>
    %49 = vector.shape_cast %48 : vector<1x32x32xf32> to vector<32x32xf32>
    %c0_39 = arith.constant 0 : index
    %c4_40 = arith.constant 4 : index
    %50 = vector.load %arg7[%c0_39, %c4_40] : memref<32x24xf32, #tpu.memory_space<vmem>>, vector<32x16xf32>
    %cst_41 = arith.constant dense<0.000000e+00> : vector<32x16xf32>
    %51 = tpu.matmul %49, %50, %cst_41 {dimension_numbers = #tpu.dot_dimension_numbers<[1], [0], [0], [1], [0, 0, 1, 1], [], []>} : vector<32x32xf32>, vector<32x16xf32>, vector<32x16xf32> -> vector<32x16xf32>
    %52 = arith.addf %47, %51 : vector<32x16xf32>
    %c5 = arith.constant 5 : index
    %c0_42 = arith.constant 0 : index
    %c0_43 = arith.constant 0 : index
    %53 = vector.load %arg2[%c5, %c0_42, %c0_43] : memref<9x32x32xf32, #tpu.memory_space<vmem>>, vector<1x32x32xf32>
    %54 = vector.shape_cast %53 : vector<1x32x32xf32> to vector<32x32xf32>
    %c0_44 = arith.constant 0 : index
    %c5_45 = arith.constant 5 : index
    %55 = vector.load %arg7[%c0_44, %c5_45] : memref<32x24xf32, #tpu.memory_space<vmem>>, vector<32x16xf32>
    %cst_46 = arith.constant dense<0.000000e+00> : vector<32x16xf32>
    %56 = tpu.matmul %54, %55, %cst_46 {dimension_numbers = #tpu.dot_dimension_numbers<[1], [0], [0], [1], [0, 0, 1, 1], [], []>} : vector<32x32xf32>, vector<32x16xf32>, vector<32x16xf32> -> vector<32x16xf32>
    %57 = arith.addf %52, %56 : vector<32x16xf32>
    %c6 = arith.constant 6 : index
    %c0_47 = arith.constant 0 : index
    %c0_48 = arith.constant 0 : index
    %58 = vector.load %arg2[%c6, %c0_47, %c0_48] : memref<9x32x32xf32, #tpu.memory_space<vmem>>, vector<1x32x32xf32>
    %59 = vector.shape_cast %58 : vector<1x32x32xf32> to vector<32x32xf32>
    %c0_49 = arith.constant 0 : index
    %c6_50 = arith.constant 6 : index
    %60 = vector.load %arg7[%c0_49, %c6_50] : memref<32x24xf32, #tpu.memory_space<vmem>>, vector<32x16xf32>
    %cst_51 = arith.constant dense<0.000000e+00> : vector<32x16xf32>
    %61 = tpu.matmul %59, %60, %cst_51 {dimension_numbers = #tpu.dot_dimension_numbers<[1], [0], [0], [1], [0, 0, 1, 1], [], []>} : vector<32x32xf32>, vector<32x16xf32>, vector<32x16xf32> -> vector<32x16xf32>
    %62 = arith.addf %57, %61 : vector<32x16xf32>
    %c7 = arith.constant 7 : index
    %c0_52 = arith.constant 0 : index
    %c0_53 = arith.constant 0 : index
    %63 = vector.load %arg2[%c7, %c0_52, %c0_53] : memref<9x32x32xf32, #tpu.memory_space<vmem>>, vector<1x32x32xf32>
    %64 = vector.shape_cast %63 : vector<1x32x32xf32> to vector<32x32xf32>
    %c0_54 = arith.constant 0 : index
    %c7_55 = arith.constant 7 : index
    %65 = vector.load %arg7[%c0_54, %c7_55] : memref<32x24xf32, #tpu.memory_space<vmem>>, vector<32x16xf32>
    %cst_56 = arith.constant dense<0.000000e+00> : vector<32x16xf32>
    %66 = tpu.matmul %64, %65, %cst_56 {dimension_numbers = #tpu.dot_dimension_numbers<[1], [0], [0], [1], [0, 0, 1, 1], [], []>} : vector<32x32xf32>, vector<32x16xf32>, vector<32x16xf32> -> vector<32x16xf32>
    %67 = arith.addf %62, %66 : vector<32x16xf32>
    %c8 = arith.constant 8 : index
    %c0_57 = arith.constant 0 : index
    %c0_58 = arith.constant 0 : index
    %68 = vector.load %arg2[%c8, %c0_57, %c0_58] : memref<9x32x32xf32, #tpu.memory_space<vmem>>, vector<1x32x32xf32>
    %69 = vector.shape_cast %68 : vector<1x32x32xf32> to vector<32x32xf32>
    %c0_59 = arith.constant 0 : index
    %c8_60 = arith.constant 8 : index
    %70 = vector.load %arg7[%c0_59, %c8_60] : memref<32x24xf32, #tpu.memory_space<vmem>>, vector<32x16xf32>
    %cst_61 = arith.constant dense<0.000000e+00> : vector<32x16xf32>
    %71 = tpu.matmul %69, %70, %cst_61 {dimension_numbers = #tpu.dot_dimension_numbers<[1], [0], [0], [1], [0, 0, 1, 1], [], []>} : vector<32x32xf32>, vector<32x16xf32>, vector<32x16xf32> -> vector<32x16xf32>
    %72 = arith.addf %67, %71 : vector<32x16xf32>
    %c0_62 = arith.constant 0 : index
    %c0_63 = arith.constant 0 : index
    %73 = vector.load %arg3[%c0_62, %c0_63] : memref<32x1xf32, #tpu.memory_space<vmem>>, vector<32x1xf32>
    %74 = vector.broadcast %73 : vector<32x1xf32> to vector<32x16xf32>
    %75 = arith.addf %72, %74 : vector<32x16xf32>
    %cst_64 = arith.constant 5.000000e-01 : f32
    %76 = vector.broadcast %cst_64 : f32 to vector<32x16xf32>
    %77 = arith.mulf %76, %75 : vector<32x16xf32>
    %cst_65 = arith.constant 0.707106769 : f32
    %78 = vector.broadcast %cst_65 : f32 to vector<32x16xf32>
    %79 = arith.mulf %75, %78 : vector<32x16xf32>
    %80 = math.absf %79 : vector<32x16xf32>
    %cst_66 = arith.constant 0.327591091 : f32
    %81 = vector.broadcast %cst_66 : f32 to vector<32x16xf32>
    %82 = arith.mulf %81, %80 : vector<32x16xf32>
    %cst_67 = arith.constant 1.000000e+00 : f32
    %83 = vector.broadcast %cst_67 : f32 to vector<32x16xf32>
    %84 = arith.addf %83, %82 : vector<32x16xf32>
    %cst_68 = arith.constant 1.000000e+00 : f32
    %85 = vector.broadcast %cst_68 : f32 to vector<32x16xf32>
    %86 = arith.divf %85, %84 : vector<32x16xf32>
    %cst_69 = arith.constant 1.06140542 : f32
    %87 = vector.broadcast %cst_69 : f32 to vector<32x16xf32>
    %88 = arith.mulf %87, %86 : vector<32x16xf32>
    %cst_70 = arith.constant -1.45315206 : f32
    %89 = vector.broadcast %cst_70 : f32 to vector<32x16xf32>
    %90 = arith.addf %88, %89 : vector<32x16xf32>
    %91 = arith.mulf %90, %86 : vector<32x16xf32>
    %cst_71 = arith.constant 1.42141378 : f32
    %92 = vector.broadcast %cst_71 : f32 to vector<32x16xf32>
    %93 = arith.addf %91, %92 : vector<32x16xf32>
    %94 = arith.mulf %93, %86 : vector<32x16xf32>
    %cst_72 = arith.constant -0.284496725 : f32
    %95 = vector.broadcast %cst_72 : f32 to vector<32x16xf32>
    %96 = arith.addf %94, %95 : vector<32x16xf32>
    %97 = arith.mulf %96, %86 : vector<32x16xf32>
    %cst_73 = arith.constant 0.254829586 : f32
    %98 = vector.broadcast %cst_73 : f32 to vector<32x16xf32>
    %99 = arith.addf %97, %98 : vector<32x16xf32>
    %100 = arith.mulf %99, %86 : vector<32x16xf32>
    %cst_74 = arith.constant 0.000000e+00 : f32
    %101 = vector.broadcast %cst_74 : f32 to vector<32x16xf32>
    %102 = arith.subf %101, %80 : vector<32x16xf32>
    %103 = arith.mulf %102, %80 : vector<32x16xf32>
    %104 = math.exp %103 : vector<32x16xf32>
    %105 = arith.mulf %100, %104 : vector<32x16xf32>
    %cst_75 = arith.constant 1.000000e+00 : f32
    %106 = vector.broadcast %cst_75 : f32 to vector<32x16xf32>
    %107 = arith.subf %106, %105 : vector<32x16xf32>
    %cst_76 = arith.constant 0.000000e+00 : f32
    %108 = vector.broadcast %cst_76 : f32 to vector<32x16xf32>
    %109 = arith.cmpf oge, %79, %108 : vector<32x16xf32>
    %cst_77 = arith.constant 0.000000e+00 : f32
    %110 = vector.broadcast %cst_77 : f32 to vector<32x16xf32>
    %111 = arith.subf %110, %107 : vector<32x16xf32>
    %112 = arith.select %109, %107, %111 : vector<32x16xi1>, vector<32x16xf32>
    %cst_78 = arith.constant 1.000000e+00 : f32
    %113 = vector.broadcast %cst_78 : f32 to vector<32x16xf32>
    %114 = arith.addf %113, %112 : vector<32x16xf32>
    %115 = arith.mulf %77, %114 : vector<32x16xf32>
    %116 = arith.addf %1, %115 : vector<32x16xf32>
    %c0_79 = arith.constant 0 : index
    %c0_80 = arith.constant 0 : index
    %c0_81 = arith.constant 0 : index
    %117 = vector.load %arg6[%c0_79, %c0_80, %c0_81] : memref<1x32x16xf32, #tpu.memory_space<vmem>>, vector<1x32x16xf32>
    %118 = vector.shape_cast %117 : vector<1x32x16xf32> to vector<32x16xf32>
    %119 = vector.shape_cast %116 : vector<32x16xf32> to vector<1x32x16xf32>
    tpu.vector_store %arg6[%c0_79, %c0_80, %c0_81], %119 {strides = array<i32>} : memref<1x32x16xf32, #tpu.memory_space<vmem>>, vector<1x32x16xf32>,
    return
  }
  func.func @transform_0(%arg0: i32) -> (i32, i32, i32) {
    %c0_i32 = arith.constant 0 : i32
    %c0_i32_0 = arith.constant 0 : i32
    %c0_i32_1 = arith.constant 0 : i32
    return %arg0, %c0_i32, %c0_i32_0 : i32, i32, i32
  }
  func.func @transform_1(%arg0: i32) -> (i32, i32, i32) {
    %c0_i32 = arith.constant 0 : i32
    %c0_i32_0 = arith.constant 0 : i32
    %c0_i32_1 = arith.constant 0 : i32
    %c0_i32_2 = arith.constant 0 : i32
    return %c0_i32, %c0_i32_0, %c0_i32_1 : i32, i32, i32
  }
  func.func @transform_2(%arg0: i32) -> (i32, i32) {
    %c0_i32 = arith.constant 0 : i32
    %c0_i32_0 = arith.constant 0 : i32
    %c0_i32_1 = arith.constant 0 : i32
    return %c0_i32, %c0_i32_0 : i32, i32
  }
  func.func @transform_3(%arg0: i32) -> (i32, i32) {
    %c0_i32 = arith.constant 0 : i32
    %c0_i32_0 = arith.constant 0 : i32
    %c0_i32_1 = arith.constant 0 : i32
    return %c0_i32, %c0_i32_0 : i32, i32
  }
  func.func @transform_4(%arg0: i32) -> (i32, i32) {
    %c0_i32 = arith.constant 0 : i32
    %c0_i32_0 = arith.constant 0 : i32
    %c0_i32_1 = arith.constant 0 : i32
    return %c0_i32, %c0_i32_0 : i32, i32
  }
  func.func @transform_5(%arg0: i32) -> (i32, i32, i32) {
    %c0_i32 = arith.constant 0 : i32
    %c0_i32_0 = arith.constant 0 : i32
    %c0_i32_1 = arith.constant 0 : i32
    return %arg0, %c0_i32, %c0_i32_0 : i32, i32, i32
  }
}

</mosaic_0001>

<llo_original>
// kernel: tpu_custom_call.1
$region0: #{tpu_custom_call.1}
  #allocation0 [shape = 'u32[]', space=smem, size = 0x4, offset = 0x4, fixed_abs, tag = 'smem constant byte address 0x4 - core index']
  #allocation1 [shape = 'u32[144,128]{1,0:T(1,128)}', space=vmem, size = 0x12000, scoped, tag = 'internal scratch']
  #allocation2 [shape = 'f32[32,24]{1,0:T(8,128)}', space=vmem, size = 0x4000, scoped, tag = 'scratch operand']
  %s0 = inlined_call_operand.vmem [shape: f32[2,32,16], index: 0, kind: input, shape index: {}]
  %s1 = inlined_call_operand.hbm [shape: f32[9,32,32], index: 1, kind: input, shape index: {}]
  %s2 = inlined_call_operand.vmem [shape: f32[32,1], index: 2, kind: input, shape index: {}]
  %s3 = inlined_call_operand.vmem [shape: f32[32,1], index: 3, kind: input, shape index: {}]
  %s4 = inlined_call_operand.vmem [shape: f32[32,1], index: 4, kind: input, shape index: {}]
  %s5 = inlined_call_operand.vmem [shape: f32[2,32,16], index: 5, kind: output, shape index: {}]
  %s6 = sld [smem:[#allocation0]]
  $region57: #{tpu_custom_call.1} parent=0
    _
  %s8 = ssub.s32 1, %s6
  %s9 = scalar_select 0, %s8, %s6
  $region1: #{tpu_custom_call.1} parent=0
    #allocation3 [shape = 'u8[147456]{0}', space=vmem, size = 0x24000, scoped, tag = 'input window, operand 1, single buffered']
    #allocation4 [shape = 's32[2]{0}', space=sflag, size = 0x8, scoped, tag = 'scoped memory for tpu_custom_call.1']
    %10 = vsyncpa [#allocation4], 0
    loop: start=0, step=1, limit=4
    $region2: #{tpu_custom_call.1} parent=1 // loop_pre_header
      _
    $region3: #{tpu_custom_call.1} parent=1 // loop_header
      %s12 = sphi 0, %s16
      %p13 = scmp.ge.s32.totalorder %s12, 4
      %s22 = sphi 0, %s24
      %s25 = sphi 0, %s22
      %s26 = sphi 0, %s25
      %s42 = sphi 0, %s26
      %s46 = sphi 0, %s46
      %s48 = sphi 0, %s46
      %s49 = sphi 0, %s48
      %s63 = sphi 0, %s49
      %s67 = sphi 0, %s67
      %s69 = sphi 0, %s67
      %s70 = sphi 0, %s69
      %s84 = sphi 0, %s70
      %s88 = sphi 0, %s88
      %s90 = sphi 0, %s88
      %s91 = sphi 0, %s90
      %s105 = sphi 0, %s91
      %s109 = sphi 0, %s109
      %s111 = sphi 0, %s109
      %s112 = sphi 0, %s111
      %s126 = sphi 0, %s112
      %s132 = sphi 0, %s134
      %s135 = sphi 0, %s132
      %s136 = sphi 0, %s135
      %s152 = sphi 0, %s136
    $region4: #{tpu_custom_call.1} parent=1 // loop_header_branch
      %15 = sbr.rel (%p13) target = $region8
    $region5: #{tpu_custom_call.1} parent=1 // loop_body
      %s17 = ssub.s32 %s12, 1
      %s18 = ssub.s32 %s12, 2
      %s19 = sadd.s32 %s12, 1
      %s20 = ssub.s32 %s12, %s19
      %p21 = scmp.eq.s32.totalorder %s20, 0
      %s23 = sadd.s32 %s22, 1
      %s24 = scalar_select %p21, %s22, %s23
      %p27 = pneg %p21
      %p28 = scmp.eq.s32.totalorder %s12, 1
      %p29 = por %p27, %p28
      %p30 = scmp.ne.s32.totalorder %s22, %s25
      %p31 = scmp.eq.s32.totalorder %s12, 0
      %p32 = por %p30, %p31
      %p33 = scmp.ne.s32.totalorder %s22, %s25
      %p34 = scmp.eq.s32.totalorder %s17, 1
      %p35 = por %p33, %p34
      %p36 = scmp.ne.s32.totalorder %s25, %s26
      %p37 = scmp.eq.s32.totalorder %s17, 0
      %p38 = por %p36, %p37
      %p39 = scmp.ne.s32.totalorder %s25, %s26
      %p40 = scmp.eq.s32.totalorder %s18, 1
      %p41 = por %p39, %p40
      %p43 = scmp.ne.s32.totalorder %s26, %s42
      %p44 = scmp.eq.s32.totalorder %s18, 0
      %p45 = por %p43, %p44
      %s47 = sadd.s32 %s46, 1
      %p50 = scmp.eq.s32.totalorder %s12, 1
      %p51 = scmp.ne.s32.totalorder %s46, %s48
      %p52 = scmp.eq.s32.totalorder %s12, 0
      %p53 = por %p51, %p52
      %p54 = scmp.ne.s32.totalorder %s46, %s48
      %p55 = scmp.eq.s32.totalorder %s17, 1
      %p56 = por %p54, %p55
      %p57 = scmp.ne.s32.totalorder %s48, %s49
      %p58 = scmp.eq.s32.totalorder %s17, 0
      %p59 = por %p57, %p58
      %p60 = scmp.ne.s32.totalorder %s48, %s49
      %p61 = scmp.eq.s32.totalorder %s18, 1
      %p62 = por %p60, %p61
      %p64 = scmp.ne.s32.totalorder %s49, %s63
      %p65 = scmp.eq.s32.totalorder %s18, 0
      %p66 = por %p64, %p65
      %s68 = sadd.s32 %s67, 1
      %p71 = scmp.eq.s32.totalorder %s12, 1
      %p72 = scmp.ne.s32.totalorder %s67, %s69
      %p73 = scmp.eq.s32.totalorder %s12, 0
      %p74 = por %p72, %p73
      %p75 = scmp.ne.s32.totalorder %s67, %s69
      %p76 = scmp.eq.s32.totalorder %s17, 1
      %p77 = por %p75, %p76
      %p78 = scmp.ne.s32.totalorder %s69, %s70
      %p79 = scmp.eq.s32.totalorder %s17, 0
      %p80 = por %p78, %p79
      %p81 = scmp.ne.s32.totalorder %s69, %s70
      %p82 = scmp.eq.s32.totalorder %s18, 1
      %p83 = por %p81, %p82
      %p85 = scmp.ne.s32.totalorder %s70, %s84
      %p86 = scmp.eq.s32.totalorder %s18, 0
      %p87 = por %p85, %p86
      %s89 = sadd.s32 %s88, 1
      %p92 = scmp.eq.s32.totalorder %s12, 1
      %p93 = scmp.ne.s32.totalorder %s88, %s90
      %p94 = scmp.eq.s32.totalorder %s12, 0
      %p95 = por %p93, %p94
      %p96 = scmp.ne.s32.totalorder %s88, %s90
      %p97 = scmp.eq.s32.totalorder %s17, 1
      %p98 = por %p96, %p97
      %p99 = scmp.ne.s32.totalorder %s90, %s91
      %p100 = scmp.eq.s32.totalorder %s17, 0
      %p101 = por %p99, %p100
      %p102 = scmp.ne.s32.totalorder %s90, %s91
      %p103 = scmp.eq.s32.totalorder %s18, 1
      %p104 = por %p102, %p103
      %p106 = scmp.ne.s32.totalorder %s91, %s105
      %p107 = scmp.eq.s32.totalorder %s18, 0
      %p108 = por %p106, %p107
      %s110 = sadd.s32 %s109, 1
      %p113 = scmp.eq.s32.totalorder %s12, 1
      %p114 = scmp.ne.s32.totalorder %s109, %s111
      %p115 = scmp.eq.s32.totalorder %s12, 0
      %p116 = por %p114, %p115
      %p117 = scmp.ne.s32.totalorder %s109, %s111
      %p118 = scmp.eq.s32.totalorder %s17, 1
      %p119 = por %p117, %p118
      %p120 = scmp.ne.s32.totalorder %s111, %s112
      %p121 = scmp.eq.s32.totalorder %s17, 0
      %p122 = por %p120, %p121
      %p123 = scmp.ne.s32.totalorder %s111, %s112
      %p124 = scmp.eq.s32.totalorder %s18, 1
      %p125 = por %p123, %p124
      %p127 = scmp.ne.s32.totalorder %s112, %s126
      %p128 = scmp.eq.s32.totalorder %s18, 0
      %p129 = por %p127, %p128
      %s130 = ssub.s32 %s12, %s19
      %p131 = scmp.eq.s32.totalorder %s130, 0
      %s133 = sadd.s32 %s132, 1
      %s134 = scalar_select %p131, %s132, %s133
      %p137 = pneg %p131
      %p138 = scmp.eq.s32.totalorder %s12, 1
      %p139 = por %p137, %p138
      %p140 = scmp.ne.s32.totalorder %s132, %s135
      %p141 = scmp.eq.s32.totalorder %s12, 0
      %p142 = por %p140, %p141
      %p143 = scmp.ne.s32.totalorder %s132, %s135
      %p144 = scmp.eq.s32.totalorder %s17, 1
      %p145 = por %p143, %p144
      %p146 = scmp.ne.s32.totalorder %s135, %s136
      %p147 = scmp.eq.s32.totalorder %s17, 0
      %p148 = por %p146, %p147
      %p149 = scmp.ne.s32.totalorder %s135, %s136
      %p150 = scmp.eq.s32.totalorder %s18, 1
      %p151 = por %p149, %p150
      %p153 = scmp.ne.s32.totalorder %s136, %s152
      %p154 = scmp.eq.s32.totalorder %s18, 0
      %p155 = por %p153, %p154
      %p156 = scmp.le.s32.totalorder 1, %s12
      %p157 = scmp.lt.s32.totalorder %s12, 3
      %p158 = pnand %p156, %p157
      %p159 = pneg %p158
      // Predicated region
      $region9: #{tpu_custom_call.1} parent=5 // pred_check
        _
      $region10: #{tpu_custom_call.1} parent=5 // pred_check_branch
        %161 = sbr.rel (%p158) target = $region12
      $region11: #{tpu_custom_call.1} parent=5 // pred_region
        %s162 = ssub.s32 %s12, 1
        // Predicated region
        $region13: #{tpu_custom_call.1} parent=11 // pred_check
          %p163 = pneg %p59
        $region14: #{tpu_custom_call.1} parent=11 // pred_check_branch
          %165 = sbr.rel (%p163) target = $region16
        $region15: #{tpu_custom_call.1} parent=11 // pred_region
          %s167 = ssub.s32 4608, 4608
          %168 = vsyncadd [#allocation4], %s167
          %s169 = sshll.u32 [#allocation3], 4
          %s170 = int_to_ptr.vmem [resolvable:$true] %s169
          %175 = dma.hbm_to_vmem [thread:$0]  %s1, 4608, %s170, [#allocation4], 128, 128, 8
        $region16: #{tpu_custom_call.1} parent=11 // pred_fallthru
          _
        // Predicated region
        $region17: #{tpu_custom_call.1} parent=11 // pred_check
          %p176 = pneg %p80
        $region18: #{tpu_custom_call.1} parent=11 // pred_check_branch
          %178 = sbr.rel (%p176) target = $region20
        $region19: #{tpu_custom_call.1} parent=11 // pred_region
          _
        $region20: #{tpu_custom_call.1} parent=11 // pred_fallthru
          _
        // Predicated region
        $region21: #{tpu_custom_call.1} parent=11 // pred_check
          %p179 = pneg %p101
        $region22: #{tpu_custom_call.1} parent=11 // pred_check_branch
          %181 = sbr.rel (%p179) target = $region24
        $region23: #{tpu_custom_call.1} parent=11 // pred_region
          _
        $region24: #{tpu_custom_call.1} parent=11 // pred_fallthru
          _
        // Predicated region
        $region25: #{tpu_custom_call.1} parent=11 // pred_check
          %p182 = pneg %p122
        $region26: #{tpu_custom_call.1} parent=11 // pred_check_branch
          %184 = sbr.rel (%p182) target = $region28
        $region27: #{tpu_custom_call.1} parent=11 // pred_region
          _
        $region28: #{tpu_custom_call.1} parent=11 // pred_fallthru
          _
      $region12: #{tpu_custom_call.1} parent=5 // pred_fallthru
        _
      %p185 = scmp.lt.s32.totalorder %s12, 2
      // Predicated region
      $region29: #{tpu_custom_call.1} parent=5 // pred_check
        %p186 = pneg %p185
      $region30: #{tpu_custom_call.1} parent=5 // pred_check_branch
        %188 = sbr.rel (%p186) target = $region32
      $region31: #{tpu_custom_call.1} parent=5 // pred_region
        // Predicated region
        $region33: #{tpu_custom_call.1} parent=31 // pred_check
          %p189 = pneg %p32
        $region34: #{tpu_custom_call.1} parent=31 // pred_check_branch
          %191 = sbr.rel (%p189) target = $region36
        $region35: #{tpu_custom_call.1} parent=31 // pred_region
          %p192 = scmp.lt.s32.totalorder %s12, 1
          %s193 = scalar_select %p192, %s12, 1
          %s194 = smul.addr %s193, 4
          %s195 = smul.addr %s194, 8
          %s196 = scalar_lea.vmem %s0, %s195
        $region36: #{tpu_custom_call.1} parent=31 // pred_fallthru
          _
      $region32: #{tpu_custom_call.1} parent=5 // pred_fallthru
        _
      %p197 = scmp.le.s32.totalorder 1, %s12
      %p198 = scmp.lt.s32.totalorder %s12, 3
      %p199 = pnand %p197, %p198
      %p200 = pneg %p199
      // Predicated region
      $region37: #{tpu_custom_call.1} parent=5 // pred_check
        _
      $region38: #{tpu_custom_call.1} parent=5 // pred_check_branch
        %202 = sbr.rel (%p199) target = $region40
      $region39: #{tpu_custom_call.1} parent=5 // pred_region
        %s203 = ssub.s32 %s12, 1
        // Predicated region
        $region41: #{tpu_custom_call.1} parent=39 // pred_check
          %p204 = pneg %p59
        $region42: #{tpu_custom_call.1} parent=39 // pred_check_branch
          %206 = sbr.rel (%p204) target = $region44
        $region43: #{tpu_custom_call.1} parent=39 // pred_region
          %207 = dma.done [#allocation4], 4608
        $region44: #{tpu_custom_call.1} parent=39 // pred_fallthru
          _
        %p208 = scmp.lt.s32.totalorder %s17, 1
        %s209 = scalar_select %p208, %s17, 1
        %s210 = smul.addr %s209, 4
        %s211 = smul.addr %s210, 8
        %s212 = scalar_lea.vmem %s0, %s211
        %p213 = pneg %p38
        %p214 = pneg %p35
        %p215 = pneg %p59
        %p216 = pneg %p56
        %p217 = pneg %p80
        %p218 = pneg %p77
        %p219 = pneg %p101
        %p220 = pneg %p98
        %p221 = pneg %p122
        %p222 = pneg %p119
        %p223 = pneg %p148
        %p224 = pneg %p145
        %p225 = scmp.lt.s32.totalorder %s17, 1
        %s226 = scalar_select %p225, %s17, 1
        %s227 = smul.addr %s226, 4
        %s228 = smul.addr %s227, 8
        %s229 = scalar_lea.vmem %s5, %s228
        %p230 = scmp.lt.s32.totalorder %s17, 1
        %s231 = scalar_select %p230, %s17, 1
        %s232 = smul.addr %s231, 4
        %s233 = smul.addr %s232, 8
        %s234 = scalar_lea.vmem %s0, %s233
        %p235 = scmp.lt.s32.totalorder %s17, 1
        %s236 = scalar_select %p235, %s17, 1
        %s237 = smul.addr %s236, 4
        %s238 = smul.addr %s237, 8
        %s239 = scalar_lea.vmem %s5, %s238
        %v240 = vld [vmem:[%s234] sm:$0xff]
        %v241 = vld [vmem:[%s234 + $0x8] sm:$0xff]
        %v242 = vld [vmem:[%s234 + $0x10] sm:$0xff]
        %v243 = vld [vmem:[%s234 + $0x18] sm:$0xff]
        %vm244 = vcmask 130048
        %v245 = vsel %vm244, %v240, 0.0
        %v246 = vsel %vm244, %v241, 0.0
        %v247 = vadd.f32 %v245, %v246
        %v248 = vsel %vm244, %v242, 0.0
        %v249 = vadd.f32 %v247, %v248
        %v250 = vsel %vm244, %v243, 0.0
        %v251 = vadd.f32 %v249, %v250
        %v252 = vrot.slane %v251, 4
        %v253 = vadd.f32 %v251, %v252
        %v254 = vrot.slane %v253, 2
        %v255 = vadd.f32 %v253, %v254
        %v256 = vrot.slane %v255, 1
        %v257 = vadd.f32 %v255, %v256
        %v258 = vrcp.pop 32.0
        %v259 = vmul.f32 %v257, %v258
        %v260 = vsub.f32 %v240, %v259
        %v261 = vsub.f32 %v241, %v259
        %v262 = vsub.f32 %v242, %v259
        %v263 = vsub.f32 %v243, %v259
        %v264 = vmul.f32 %v260, %v260
        %v265 = vmul.f32 %v261, %v261
        %v266 = vmul.f32 %v262, %v262
        %v267 = vmul.f32 %v263, %v263
        %v268 = vsel %vm244, %v264, 0.0
        %v269 = vsel %vm244, %v265, 0.0
        %v270 = vadd.f32 %v268, %v269
        %v271 = vsel %vm244, %v266, 0.0
        %v272 = vadd.f32 %v270, %v271
        %v273 = vsel %vm244, %v267, 0.0
        %v274 = vadd.f32 %v272, %v273
        %v275 = vrot.slane %v274, 4
        %v276 = vadd.f32 %v274, %v275
        %v277 = vrot.slane %v276, 2
        %v278 = vadd.f32 %v276, %v277
        %v279 = vrot.slane %v278, 1
        %v280 = vadd.f32 %v278, %v279
        %v281 = vmul.f32 %v280, %v258
        %v282 = vadd.f32 %v281, 1e-05
        %v283 = vrsqrt.pop %v282
        %v284 = vmul.f32 %v260, %v283
        %v285 = vmul.f32 %v261, %v283
        %v286 = vmul.f32 %v262, %v283
        %v287 = vmul.f32 %v263, %v283
        %v288 = vld [vmem:[%s3] sm:$0xff]
        %v289 = vld [vmem:[%s3 + $0x8] sm:$0xff]
        %v290 = vld [vmem:[%s3 + $0x10] sm:$0xff]
        %v291 = vld [vmem:[%s3 + $0x18] sm:$0xff]
        %293 = vset.pattern.permute.xlu0 0
        %294 = vperm.xlu0 %293, %v288
        %v295 = vpop.permute.xlu0 %294
        %298 = vset.pattern.permute.xlu0 0
        %299 = vperm.xlu0 %298, %v289
        %v300 = vpop.permute.xlu0 %299
        %303 = vset.pattern.permute.xlu0 0
        %304 = vperm.xlu0 %303, %v290
        %v305 = vpop.permute.xlu0 %304
        %308 = vset.pattern.permute.xlu0 0
        %309 = vperm.xlu0 %308, %v291
        %v310 = vpop.permute.xlu0 %309
        %v312 = vmul.f32 %v284, %v295
        %v313 = vmul.f32 %v285, %v300
        %v314 = vmul.f32 %v286, %v305
        %v315 = vmul.f32 %v287, %v310
        %v316 = vld [vmem:[%s4] sm:$0xff]
        %v317 = vld [vmem:[%s4 + $0x8] sm:$0xff]
        %v318 = vld [vmem:[%s4 + $0x10] sm:$0xff]
        %v319 = vld [vmem:[%s4 + $0x18] sm:$0xff]
        %321 = vset.pattern.permute.xlu0 0
        %322 = vperm.xlu0 %321, %v316
        %v323 = vpop.permute.xlu0 %322
        %326 = vset.pattern.permute.xlu0 0
        %327 = vperm.xlu0 %326, %v317
        %v328 = vpop.permute.xlu0 %327
        %331 = vset.pattern.permute.xlu0 0
        %332 = vperm.xlu0 %331, %v318
        %v333 = vpop.permute.xlu0 %332
        %336 = vset.pattern.permute.xlu0 0
        %337 = vperm.xlu0 %336, %v319
        %v338 = vpop.permute.xlu0 %337
        %v340 = vadd.f32 %v312, %v323
        %v341 = vadd.f32 %v313, %v328
        %v342 = vadd.f32 %v314, %v333
        %v343 = vadd.f32 %v315, %v338
        %vm344 = vcmask 195584
        %345 = vst.msk [vmem:[#allocation2] sm:$0xff] %vm344, 0.0
        %346 = vst.msk [vmem:[#allocation2 + $0x8] sm:$0xff] %vm344, 0.0
        %347 = vst.msk [vmem:[#allocation2 + $0x10] sm:$0xff] %vm344, 0.0
        %348 = vst.msk [vmem:[#allocation2 + $0x18] sm:$0xff] %vm344, 0.0
        %353 = vrot.lane.b32.xlu0 %v340, 4
        %v354 = vpop.permute.xlu0 %353
        %355 = vrot.lane.b32.xlu0 %v341, 4
        %v356 = vpop.permute.xlu0 %355
        %357 = vrot.lane.b32.xlu0 %v342, 4
        %v358 = vpop.permute.xlu0 %357
        %359 = vrot.lane.b32.xlu0 %v343, 4
        %v360 = vpop.permute.xlu0 %359
        %vm365 = vcmask 162848
        %366 = vst.msk [vmem:[#allocation2] sm:$0xff] %vm365, %v354
        %367 = vst.msk [vmem:[#allocation2 + $0x8] sm:$0xff] %vm365, %v356
        %368 = vst.msk [vmem:[#allocation2 + $0x10] sm:$0xff] %vm365, %v358
        %369 = vst.msk [vmem:[#allocation2 + $0x18] sm:$0xff] %vm365, %v360
        %v370 = vld [vmem:[#allocation3] sm:$0xff]
        %v371 = vld [vmem:[#allocation3 + $0x8] sm:$0xff]
        %v372 = vld [vmem:[#allocation3 + $0x10] sm:$0xff]
        %v373 = vld [vmem:[#allocation3 + $0x18] sm:$0xff]
        %v374 = vld [vmem:[#allocation2] sm:$0xff]
        %v375 = vld [vmem:[#allocation2 + $0x8] sm:$0xff]
        %v376 = vld [vmem:[#allocation2 + $0x10] sm:$0xff]
        %v377 = vld [vmem:[#allocation2 + $0x18] sm:$0xff]
        %s378 = scalar_lea.vmem [#allocation3], 32
        %v379 = vld [vmem:[%s378] sm:$0xff]
        %v380 = vld [vmem:[%s378 + $0x8] sm:$0xff]
        %v381 = vld [vmem:[%s378 + $0x10] sm:$0xff]
        %v382 = vld [vmem:[%s378 + $0x18] sm:$0xff]
        %387 = vrot.lane.b32.xlu0 %v374, 127
        %v388 = vpop.permute.xlu0 %387
        %389 = vrot.lane.b32.xlu0 %v375, 127
        %v390 = vpop.permute.xlu0 %389
        %391 = vrot.lane.b32.xlu0 %v376, 127
        %v392 = vpop.permute.xlu0 %391
        %393 = vrot.lane.b32.xlu0 %v377, 127
        %v394 = vpop.permute.xlu0 %393
        %vm399 = vcmask 261120
        %v401 = vsel %vm399, %v379, 0
        %v404 = vsel %vm399, %v380, 0
        %v407 = vsel %vm399, %v381, 0
        %v410 = vsel %vm399, %v382, 0
        %412 = vmatprep.subr.mxu0 0.0
        %413 = vmatpush1.msra.mxu0 %v388
        %414 = vmatprep.subr.mxu0 0.0
        %415 = vmatpush1.msra.mxu0 %v390
        %416 = vmatprep.subr.mxu0 0.0
        %417 = vmatpush1.msra.mxu0 %v392
        %418 = vmatprep.subr.mxu0 0.0
        %419 = vmatpush1.msra.mxu0 %v394
        %420 = vmatprep.subr.mxu0 0.0
        %421 = vmatpush1.msra.mxu0 0.0
        %422 = vmatprep.subr.mxu0 0.0
        %423 = vmatpush1.msra.mxu0 0.0
        %424 = vmatprep.subr.mxu0 0.0
        %425 = vmatpush1.msra.mxu0 0.0
        %426 = vmatprep.subr.mxu0 0.0
        %427 = vmatpush1.msra.mxu0 0.0
        %428 = vmatprep.subr.mxu0 0.0
        %429 = vmatpush1.msra.mxu0 0.0
        %430 = vmatprep.subr.mxu0 0.0
        %431 = vmatpush1.msra.mxu0 0.0
        %432 = vmatprep.subr.mxu0 0.0
        %433 = vmatpush1.msra.mxu0 0.0
        %434 = vmatprep.subr.mxu0 0.0
        %435 = vmatpush1.msra.mxu0 0.0
        %436 = vmatprep.subr.mxu0 0.0
        %437 = vmatpush1.msra.mxu0 0.0
        %438 = vmatprep.subr.mxu0 0.0
        %439 = vmatpush1.msra.mxu0 0.0
        %440 = vmatprep.subr.mxu0 0.0
        %441 = vmatpush1.msra.mxu0 0.0
        %442 = vmatprep.subr.mxu0 0.0
        %443 = vmatpush1.msra.mxu0 0.0
        %444 = vmatprep.subr.mxu0 0.0
        %445 = vmatpush1.msra.mxu0 0.0
        %446 = vmatprep.subr.mxu0 0.0
        %447 = vmatpush1.msra.mxu0 0.0
        %448 = vmatprep.subr.mxu0 0.0
        %449 = vmatpush1.msra.mxu0 0.0
        %450 = vmatprep.subr.mxu0 0.0
        %451 = vmatpush1.msra.mxu0 0.0
        %452 = vmatprep.subr.mxu0 0.0
        %453 = vmatpush1.msra.mxu0 0.0
        %454 = vmatprep.subr.mxu0 0.0
        %455 = vmatpush1.msra.mxu0 0.0
        %456 = vmatprep.subr.mxu0 0.0
        %457 = vmatpush1.msra.mxu0 0.0
        %458 = vmatprep.subr.mxu0 0.0
        %459 = vmatpush1.msra.mxu0 0.0
        %460 = vmatprep.subr.mxu0 0.0
        %461 = vmatpush1.msra.mxu0 0.0
        %462 = vmatprep.subr.mxu0 0.0
        %463 = vmatpush1.msra.mxu0 0.0
        %464 = vmatprep.subr.mxu0 0.0
        %465 = vmatpush1.msra.mxu0 0.0
        %466 = vmatprep.subr.mxu0 0.0
        %467 = vmatpush1.msra.mxu0 0.0
        %468 = vmatprep.subr.mxu0 0.0
        %469 = vmatpush1.msra.mxu0 0.0
        %470 = vmatprep.subr.mxu0 0.0
        %471 = vmatpush1.msra.mxu0 0.0
        %472 = vmatprep.subr.mxu0 0.0
        %473 = vmatpush1.msra.mxu0 0.0
        %474 = vmatprep.subr.mxu0 0.0
        %475 = vmatpush1.msra.mxu0 0.0
        %476 = vmatprep.mubr.f32.mxu0 0.0
        %477 = vmatmul.mubr.f32.gmra.mrb[0].mxu0 %v401
        %v478 = vpop.f32.mrb[0].mxu0
        %v479 = vadd.f32 0.0, %v478
        %v480 = vpop.f32.mrb[0].mxu0
        %481 = vmatprep.mubr.f32.mxu0 0.0
        %482 = vmatmul.mubr.f32.gmra.mrb[0].mxu0 %v404
        %v483 = vpop.f32.mrb[0].mxu0
        %v484 = vadd.f32 0.0, %v483
        %v485 = vpop.f32.mrb[0].mxu0
        %486 = vmatprep.mubr.f32.mxu0 0.0
        %487 = vmatmul.mubr.f32.gmra.mrb[0].mxu0 %v407
        %v488 = vpop.f32.mrb[0].mxu0
        %v489 = vadd.f32 0.0, %v488
        %v490 = vpop.f32.mrb[0].mxu0
        %491 = vmatprep.mubr.f32.mxu0 0.0
        %492 = vmatmul.mubr.f32.gmra.mrb[0].mxu0 %v410
        %v493 = vpop.f32.mrb[0].mxu0
        %v494 = vadd.f32 0.0, %v493
        %v495 = vpop.f32.mrb[0].mxu0
        %496 = vdwg.mxu0
        %v498 = vsel %vm399, %v370, 0
        %v501 = vsel %vm399, %v371, 0
        %v504 = vsel %vm399, %v372, 0
        %v507 = vsel %vm399, %v373, 0
        %509 = vmatprep.subr.mxu0 0.0
        %510 = vmatpush1.msra.mxu0 %v374
        %511 = vmatprep.subr.mxu0 0.0
        %512 = vmatpush1.msra.mxu0 %v375
        %513 = vmatprep.subr.mxu0 0.0
        %514 = vmatpush1.msra.mxu0 %v376
        %515 = vmatprep.subr.mxu0 0.0
        %516 = vmatpush1.msra.mxu0 %v377
        %517 = vmatprep.subr.mxu0 0.0
        %518 = vmatpush1.msra.mxu0 0.0
        %519 = vmatprep.subr.mxu0 0.0
        %520 = vmatpush1.msra.mxu0 0.0
        %521 = vmatprep.subr.mxu0 0.0
        %522 = vmatpush1.msra.mxu0 0.0
        %523 = vmatprep.subr.mxu0 0.0
        %524 = vmatpush1.msra.mxu0 0.0
        %525 = vmatprep.subr.mxu0 0.0
        %526 = vmatpush1.msra.mxu0 0.0
        %527 = vmatprep.subr.mxu0 0.0
        %528 = vmatpush1.msra.mxu0 0.0
        %529 = vmatprep.subr.mxu0 0.0
        %530 = vmatpush1.msra.mxu0 0.0
        %531 = vmatprep.subr.mxu0 0.0
        %532 = vmatpush1.msra.mxu0 0.0
        %533 = vmatprep.subr.mxu0 0.0
        %534 = vmatpush1.msra.mxu0 0.0
        %535 = vmatprep.subr.mxu0 0.0
        %536 = vmatpush1.msra.mxu0 0.0
        %537 = vmatprep.subr.mxu0 0.0
        %538 = vmatpush1.msra.mxu0 0.0
        %539 = vmatprep.subr.mxu0 0.0
        %540 = vmatpush1.msra.mxu0 0.0
        %541 = vmatprep.subr.mxu0 0.0
        %542 = vmatpush1.msra.mxu0 0.0
        %543 = vmatprep.subr.mxu0 0.0
        %544 = vmatpush1.msra.mxu0 0.0
        %545 = vmatprep.subr.mxu0 0.0
        %546 = vmatpush1.msra.mxu0 0.0
        %547 = vmatprep.subr.mxu0 0.0
        %548 = vmatpush1.msra.mxu0 0.0
        %549 = vmatprep.subr.mxu0 0.0
        %550 = vmatpush1.msra.mxu0 0.0
        %551 = vmatprep.subr.mxu0 0.0
        %552 = vmatpush1.msra.mxu0 0.0
        %553 = vmatprep.subr.mxu0 0.0
        %554 = vmatpush1.msra.mxu0 0.0
        %555 = vmatprep.subr.mxu0 0.0
        %556 = vmatpush1.msra.mxu0 0.0
        %557 = vmatprep.subr.mxu0 0.0
        %558 = vmatpush1.msra.mxu0 0.0
        %559 = vmatprep.subr.mxu0 0.0
        %560 = vmatpush1.msra.mxu0 0.0
        %561 = vmatprep.subr.mxu0 0.0
        %562 = vmatpush1.msra.mxu0 0.0
        %563 = vmatprep.subr.mxu0 0.0
        %564 = vmatpush1.msra.mxu0 0.0
        %565 = vmatprep.subr.mxu0 0.0
        %566 = vmatpush1.msra.mxu0 0.0
        %567 = vmatprep.subr.mxu0 0.0
        %568 = vmatpush1.msra.mxu0 0.0
        %569 = vmatprep.subr.mxu0 0.0
        %570 = vmatpush1.msra.mxu0 0.0
        %571 = vmatprep.subr.mxu0 0.0
        %572 = vmatpush1.msra.mxu0 0.0
        %573 = vmatprep.mubr.f32.mxu0 0.0
        %574 = vmatmul.mubr.f32.gmra.mrb[0].mxu0 %v498
        %v575 = vpop.f32.mrb[0].mxu0
        %v576 = vadd.f32 %v479, %v575
        %v577 = vpop.f32.mrb[0].mxu0
        %578 = vmatprep.mubr.f32.mxu0 0.0
        %579 = vmatmul.mubr.f32.gmra.mrb[0].mxu0 %v501
        %v580 = vpop.f32.mrb[0].mxu0
        %v581 = vadd.f32 %v484, %v580
        %v582 = vpop.f32.mrb[0].mxu0
        %583 = vmatprep.mubr.f32.mxu0 0.0
        %584 = vmatmul.mubr.f32.gmra.mrb[0].mxu0 %v504
        %v585 = vpop.f32.mrb[0].mxu0
        %v586 = vadd.f32 %v489, %v585
        %v587 = vpop.f32.mrb[0].mxu0
        %588 = vmatprep.mubr.f32.mxu0 0.0
        %589 = vmatmul.mubr.f32.gmra.mrb[0].mxu0 %v507
        %v590 = vpop.f32.mrb[0].mxu0
        %v591 = vadd.f32 %v494, %v590
        %v592 = vpop.f32.mrb[0].mxu0
        %593 = vdwg.mxu0
        %s594 = scalar_lea.vmem [#allocation3], 64
        %v595 = vld [vmem:[%s594] sm:$0xff]
        %v596 = vld [vmem:[%s594 + $0x8] sm:$0xff]
        %v597 = vld [vmem:[%s594 + $0x10] sm:$0xff]
        %v598 = vld [vmem:[%s594 + $0x18] sm:$0xff]
        %599 = vrot.lane.b32.xlu0 %v374, 126
        %v600 = vpop.permute.xlu0 %599
        %601 = vrot.lane.b32.xlu0 %v375, 126
        %v602 = vpop.permute.xlu0 %601
        %603 = vrot.lane.b32.xlu0 %v376, 126
        %v604 = vpop.permute.xlu0 %603
        %605 = vrot.lane.b32.xlu0 %v377, 126
        %v606 = vpop.permute.xlu0 %605
        %v612 = vsel %vm399, %v595, 0
        %v615 = vsel %vm399, %v596, 0
        %v618 = vsel %vm399, %v597, 0
        %v621 = vsel %vm399, %v598, 0
        %623 = vmatprep.subr.mxu0 0.0
        %624 = vmatpush1.msra.mxu0 %v600
        %625 = vmatprep.subr.mxu0 0.0
        %626 = vmatpush1.msra.mxu0 %v602
        %627 = vmatprep.subr.mxu0 0.0
        %628 = vmatpush1.msra.mxu0 %v604
        %629 = vmatprep.subr.mxu0 0.0
        %630 = vmatpush1.msra.mxu0 %v606
        %631 = vmatprep.subr.mxu0 0.0
        %632 = vmatpush1.msra.mxu0 0.0
        %633 = vmatprep.subr.mxu0 0.0
        %634 = vmatpush1.msra.mxu0 0.0
        %635 = vmatprep.subr.mxu0 0.0
        %636 = vmatpush1.msra.mxu0 0.0
        %637 = vmatprep.subr.mxu0 0.0
        %638 = vmatpush1.msra.mxu0 0.0
        %639 = vmatprep.subr.mxu0 0.0
        %640 = vmatpush1.msra.mxu0 0.0
        %641 = vmatprep.subr.mxu0 0.0
        %642 = vmatpush1.msra.mxu0 0.0
        %643 = vmatprep.subr.mxu0 0.0
        %644 = vmatpush1.msra.mxu0 0.0
        %645 = vmatprep.subr.mxu0 0.0
        %646 = vmatpush1.msra.mxu0 0.0
        %647 = vmatprep.subr.mxu0 0.0
        %648 = vmatpush1.msra.mxu0 0.0
        %649 = vmatprep.subr.mxu0 0.0
        %650 = vmatpush1.msra.mxu0 0.0
        %651 = vmatprep.subr.mxu0 0.0
        %652 = vmatpush1.msra.mxu0 0.0
        %653 = vmatprep.subr.mxu0 0.0
        %654 = vmatpush1.msra.mxu0 0.0
        %655 = vmatprep.subr.mxu0 0.0
        %656 = vmatpush1.msra.mxu0 0.0
        %657 = vmatprep.subr.mxu0 0.0
        %658 = vmatpush1.msra.mxu0 0.0
        %659 = vmatprep.subr.mxu0 0.0
        %660 = vmatpush1.msra.mxu0 0.0
        %661 = vmatprep.subr.mxu0 0.0
        %662 = vmatpush1.msra.mxu0 0.0
        %663 = vmatprep.subr.mxu0 0.0
        %664 = vmatpush1.msra.mxu0 0.0
        %665 = vmatprep.subr.mxu0 0.0
        %666 = vmatpush1.msra.mxu0 0.0
        %667 = vmatprep.subr.mxu0 0.0
        %668 = vmatpush1.msra.mxu0 0.0
        %669 = vmatprep.subr.mxu0 0.0
        %670 = vmatpush1.msra.mxu0 0.0
        %671 = vmatprep.subr.mxu0 0.0
        %672 = vmatpush1.msra.mxu0 0.0
        %673 = vmatprep.subr.mxu0 0.0
        %674 = vmatpush1.msra.mxu0 0.0
        %675 = vmatprep.subr.mxu0 0.0
        %676 = vmatpush1.msra.mxu0 0.0
        %677 = vmatprep.subr.mxu0 0.0
        %678 = vmatpush1.msra.mxu0 0.0
        %679 = vmatprep.subr.mxu0 0.0
        %680 = vmatpush1.msra.mxu0 0.0
        %681 = vmatprep.subr.mxu0 0.0
        %682 = vmatpush1.msra.mxu0 0.0
        %683 = vmatprep.subr.mxu0 0.0
        %684 = vmatpush1.msra.mxu0 0.0
        %685 = vmatprep.subr.mxu0 0.0
        %686 = vmatpush1.msra.mxu0 0.0
        %687 = vmatprep.mubr.f32.mxu0 0.0
        %688 = vmatmul.mubr.f32.gmra.mrb[0].mxu0 %v612
        %v689 = vpop.f32.mrb[0].mxu0
        %v690 = vadd.f32 0.0, %v689
        %v691 = vpop.f32.mrb[0].mxu0
        %692 = vmatprep.mubr.f32.mxu0 0.0
        %693 = vmatmul.mubr.f32.gmra.mrb[0].mxu0 %v615
        %v694 = vpop.f32.mrb[0].mxu0
        %v695 = vadd.f32 0.0, %v694
        %v696 = vpop.f32.mrb[0].mxu0
        %697 = vmatprep.mubr.f32.mxu0 0.0
        %698 = vmatmul.mubr.f32.gmra.mrb[0].mxu0 %v618
        %v699 = vpop.f32.mrb[0].mxu0
        %v700 = vadd.f32 0.0, %v699
        %v701 = vpop.f32.mrb[0].mxu0
        %702 = vmatprep.mubr.f32.mxu0 0.0
        %703 = vmatmul.mubr.f32.gmra.mrb[0].mxu0 %v621
        %v704 = vpop.f32.mrb[0].mxu0
        %v705 = vadd.f32 0.0, %v704
        %v706 = vpop.f32.mrb[0].mxu0
        %707 = vdwg.mxu0
        %v708 = vadd.f32 %v576, %v690
        %v709 = vadd.f32 %v581, %v695
        %v710 = vadd.f32 %v586, %v700
        %v711 = vadd.f32 %v591, %v705
        %s712 = scalar_lea.vmem [#allocation3], 96
        %v713 = vld [vmem:[%s712] sm:$0xff]
        %v714 = vld [vmem:[%s712 + $0x8] sm:$0xff]
        %v715 = vld [vmem:[%s712 + $0x10] sm:$0xff]
        %v716 = vld [vmem:[%s712 + $0x18] sm:$0xff]
        %717 = vrot.lane.b32.xlu0 %v374, 125
        %v718 = vpop.permute.xlu0 %717
        %719 = vrot.lane.b32.xlu0 %v375, 125
        %v720 = vpop.permute.xlu0 %719
        %721 = vrot.lane.b32.xlu0 %v376, 125
        %v722 = vpop.permute.xlu0 %721
        %723 = vrot.lane.b32.xlu0 %v377, 125
        %v724 = vpop.permute.xlu0 %723
        %v730 = vsel %vm399, %v713, 0
        %v733 = vsel %vm399, %v714, 0
        %v736 = vsel %vm399, %v715, 0
        %v739 = vsel %vm399, %v716, 0
        %741 = vmatprep.subr.mxu0 0.0
        %742 = vmatpush1.msra.mxu0 %v718
        %743 = vmatprep.subr.mxu0 0.0
        %744 = vmatpush1.msra.mxu0 %v720
        %745 = vmatprep.subr.mxu0 0.0
        %746 = vmatpush1.msra.mxu0 %v722
        %747 = vmatprep.subr.mxu0 0.0
        %748 = vmatpush1.msra.mxu0 %v724
        %749 = vmatprep.subr.mxu0 0.0
        %750 = vmatpush1.msra.mxu0 0.0
        %751 = vmatprep.subr.mxu0 0.0
        %752 = vmatpush1.msra.mxu0 0.0
        %753 = vmatprep.subr.mxu0 0.0
        %754 = vmatpush1.msra.mxu0 0.0
        %755 = vmatprep.subr.mxu0 0.0
        %756 = vmatpush1.msra.mxu0 0.0
        %757 = vmatprep.subr.mxu0 0.0
        %758 = vmatpush1.msra.mxu0 0.0
        %759 = vmatprep.subr.mxu0 0.0
        %760 = vmatpush1.msra.mxu0 0.0
        %761 = vmatprep.subr.mxu0 0.0
        %762 = vmatpush1.msra.mxu0 0.0
        %763 = vmatprep.subr.mxu0 0.0
        %764 = vmatpush1.msra.mxu0 0.0
        %765 = vmatprep.subr.mxu0 0.0
        %766 = vmatpush1.msra.mxu0 0.0
        %767 = vmatprep.subr.mxu0 0.0
        %768 = vmatpush1.msra.mxu0 0.0
        %769 = vmatprep.subr.mxu0 0.0
        %770 = vmatpush1.msra.mxu0 0.0
        %771 = vmatprep.subr.mxu0 0.0
        %772 = vmatpush1.msra.mxu0 0.0
        %773 = vmatprep.subr.mxu0 0.0
        %774 = vmatpush1.msra.mxu0 0.0
        %775 = vmatprep.subr.mxu0 0.0
        %776 = vmatpush1.msra.mxu0 0.0
        %777 = vmatprep.subr.mxu0 0.0
        %778 = vmatpush1.msra.mxu0 0.0
        %779 = vmatprep.subr.mxu0 0.0
        %780 = vmatpush1.msra.mxu0 0.0
        %781 = vmatprep.subr.mxu0 0.0
        %782 = vmatpush1.msra.mxu0 0.0
        %783 = vmatprep.subr.mxu0 0.0
        %784 = vmatpush1.msra.mxu0 0.0
        %785 = vmatprep.subr.mxu0 0.0
        %786 = vmatpush1.msra.mxu0 0.0
        %787 = vmatprep.subr.mxu0 0.0
        %788 = vmatpush1.msra.mxu0 0.0
        %789 = vmatprep.subr.mxu0 0.0
        %790 = vmatpush1.msra.mxu0 0.0
        %791 = vmatprep.subr.mxu0 0.0
        %792 = vmatpush1.msra.mxu0 0.0
        %793 = vmatprep.subr.mxu0 0.0
        %794 = vmatpush1.msra.mxu0 0.0
        %795 = vmatprep.subr.mxu0 0.0
        %796 = vmatpush1.msra.mxu0 0.0
        %797 = vmatprep.subr.mxu0 0.0
        %798 = vmatpush1.msra.mxu0 0.0
        %799 = vmatprep.subr.mxu0 0.0
        %800 = vmatpush1.msra.mxu0 0.0
        %801 = vmatprep.subr.mxu0 0.0
        %802 = vmatpush1.msra.mxu0 0.0
        %803 = vmatprep.subr.mxu0 0.0
        %804 = vmatpush1.msra.mxu0 0.0
        %805 = vmatprep.mubr.f32.mxu0 0.0
        %806 = vmatmul.mubr.f32.gmra.mrb[0].mxu0 %v730
        %v807 = vpop.f32.mrb[0].mxu0
        %v808 = vadd.f32 0.0, %v807
        %v809 = vpop.f32.mrb[0].mxu0
        %810 = vmatprep.mubr.f32.mxu0 0.0
        %811 = vmatmul.mubr.f32.gmra.mrb[0].mxu0 %v733
        %v812 = vpop.f32.mrb[0].mxu0
        %v813 = vadd.f32 0.0, %v812
        %v814 = vpop.f32.mrb[0].mxu0
        %815 = vmatprep.mubr.f32.mxu0 0.0
        %816 = vmatmul.mubr.f32.gmra.mrb[0].mxu0 %v736
        %v817 = vpop.f32.mrb[0].mxu0
        %v818 = vadd.f32 0.0, %v817
        %v819 = vpop.f32.mrb[0].mxu0
        %820 = vmatprep.mubr.f32.mxu0 0.0
        %821 = vmatmul.mubr.f32.gmra.mrb[0].mxu0 %v739
        %v822 = vpop.f32.mrb[0].mxu0
        %v823 = vadd.f32 0.0, %v822
        %v824 = vpop.f32.mrb[0].mxu0
        %825 = vdwg.mxu0
        %v826 = vadd.f32 %v708, %v808
        %v827 = vadd.f32 %v709, %v813
        %v828 = vadd.f32 %v710, %v818
        %v829 = vadd.f32 %v711, %v823
        %s830 = scalar_lea.vmem [#allocation3], 128
        %v831 = vld [vmem:[%s830] sm:$0xff]
        %v832 = vld [vmem:[%s830 + $0x8] sm:$0xff]
        %v833 = vld [vmem:[%s830 + $0x10] sm:$0xff]
        %v834 = vld [vmem:[%s830 + $0x18] sm:$0xff]
        %835 = vrot.lane.b32.xlu0 %v374, 124
        %v836 = vpop.permute.xlu0 %835
        %837 = vrot.lane.b32.xlu0 %v375, 124
        %v838 = vpop.permute.xlu0 %837
        %839 = vrot.lane.b32.xlu0 %v376, 124
        %v840 = vpop.permute.xlu0 %839
        %841 = vrot.lane.b32.xlu0 %v377, 124
        %v842 = vpop.permute.xlu0 %841
        %v848 = vsel %vm399, %v831, 0
        %v851 = vsel %vm399, %v832, 0
        %v854 = vsel %vm399, %v833, 0
        %v857 = vsel %vm399, %v834, 0
        %859 = vmatprep.subr.mxu0 0.0
        %860 = vmatpush1.msra.mxu0 %v836
        %861 = vmatprep.subr.mxu0 0.0
        %862 = vmatpush1.msra.mxu0 %v838
        %863 = vmatprep.subr.mxu0 0.0
        %864 = vmatpush1.msra.mxu0 %v840
        %865 = vmatprep.subr.mxu0 0.0
        %866 = vmatpush1.msra.mxu0 %v842
        %867 = vmatprep.subr.mxu0 0.0
        %868 = vmatpush1.msra.mxu0 0.0
        %869 = vmatprep.subr.mxu0 0.0
        %870 = vmatpush1.msra.mxu0 0.0
        %871 = vmatprep.subr.mxu0 0.0
        %872 = vmatpush1.msra.mxu0 0.0
        %873 = vmatprep.subr.mxu0 0.0
        %874 = vmatpush1.msra.mxu0 0.0
        %875 = vmatprep.subr.mxu0 0.0
        %876 = vmatpush1.msra.mxu0 0.0
        %877 = vmatprep.subr.mxu0 0.0
        %878 = vmatpush1.msra.mxu0 0.0
        %879 = vmatprep.subr.mxu0 0.0
        %880 = vmatpush1.msra.mxu0 0.0
        %881 = vmatprep.subr.mxu0 0.0
        %882 = vmatpush1.msra.mxu0 0.0
        %883 = vmatprep.subr.mxu0 0.0
        %884 = vmatpush1.msra.mxu0 0.0
        %885 = vmatprep.subr.mxu0 0.0
        %886 = vmatpush1.msra.mxu0 0.0
        %887 = vmatprep.subr.mxu0 0.0
        %888 = vmatpush1.msra.mxu0 0.0
        %889 = vmatprep.subr.mxu0 0.0
        %890 = vmatpush1.msra.mxu0 0.0
        %891 = vmatprep.subr.mxu0 0.0
        %892 = vmatpush1.msra.mxu0 0.0
        %893 = vmatprep.subr.mxu0 0.0
        %894 = vmatpush1.msra.mxu0 0.0
        %895 = vmatprep.subr.mxu0 0.0
        %896 = vmatpush1.msra.mxu0 0.0
        %897 = vmatprep.subr.mxu0 0.0
        %898 = vmatpush1.msra.mxu0 0.0
        %899 = vmatprep.subr.mxu0 0.0
        %900 = vmatpush1.msra.mxu0 0.0
        %901 = vmatprep.subr.mxu0 0.0
        %902 = vmatpush1.msra.mxu0 0.0
        %903 = vmatprep.subr.mxu0 0.0
        %904 = vmatpush1.msra.mxu0 0.0
        %905 = vmatprep.subr.mxu0 0.0
        %906 = vmatpush1.msra.mxu0 0.0
        %907 = vmatprep.subr.mxu0 0.0
        %908 = vmatpush1.msra.mxu0 0.0
        %909 = vmatprep.subr.mxu0 0.0
        %910 = vmatpush1.msra.mxu0 0.0
        %911 = vmatprep.subr.mxu0 0.0
        %912 = vmatpush1.msra.mxu0 0.0
        %913 = vmatprep.subr.mxu0 0.0
        %914 = vmatpush1.msra.mxu0 0.0
        %915 = vmatprep.subr.mxu0 0.0
        %916 = vmatpush1.msra.mxu0 0.0
        %917 = vmatprep.subr.mxu0 0.0
        %918 = vmatpush1.msra.mxu0 0.0
        %919 = vmatprep.subr.mxu0 0.0
        %920 = vmatpush1.msra.mxu0 0.0
        %921 = vmatprep.subr.mxu0 0.0
        %922 = vmatpush1.msra.mxu0 0.0
        %923 = vmatprep.mubr.f32.mxu0 0.0
        %924 = vmatmul.mubr.f32.gmra.mrb[0].mxu0 %v848
        %v925 = vpop.f32.mrb[0].mxu0
        %v926 = vadd.f32 0.0, %v925
        %v927 = vpop.f32.mrb[0].mxu0
        %928 = vmatprep.mubr.f32.mxu0 0.0
        %929 = vmatmul.mubr.f32.gmra.mrb[0].mxu0 %v851
        %v930 = vpop.f32.mrb[0].mxu0
        %v931 = vadd.f32 0.0, %v930
        %v932 = vpop.f32.mrb[0].mxu0
        %933 = vmatprep.mubr.f32.mxu0 0.0
        %934 = vmatmul.mubr.f32.gmra.mrb[0].mxu0 %v854
        %v935 = vpop.f32.mrb[0].mxu0
        %v936 = vadd.f32 0.0, %v935
        %v937 = vpop.f32.mrb[0].mxu0
        %938 = vmatprep.mubr.f32.mxu0 0.0
        %939 = vmatmul.mubr.f32.gmra.mrb[0].mxu0 %v857
        %v940 = vpop.f32.mrb[0].mxu0
        %v941 = vadd.f32 0.0, %v940
        %v942 = vpop.f32.mrb[0].mxu0
        %943 = vdwg.mxu0
        %v944 = vadd.f32 %v826, %v926
        %v945 = vadd.f32 %v827, %v931
        %v946 = vadd.f32 %v828, %v936
        %v947 = vadd.f32 %v829, %v941
        %s948 = scalar_lea.vmem [#allocation3], 160
        %v949 = vld [vmem:[%s948] sm:$0xff]
        %v950 = vld [vmem:[%s948 + $0x8] sm:$0xff]
        %v951 = vld [vmem:[%s948 + $0x10] sm:$0xff]
        %v952 = vld [vmem:[%s948 + $0x18] sm:$0xff]
        %953 = vrot.lane.b32.xlu0 %v374, 123
        %v954 = vpop.permute.xlu0 %953
        %955 = vrot.lane.b32.xlu0 %v375, 123
        %v956 = vpop.permute.xlu0 %955
        %957 = vrot.lane.b32.xlu0 %v376, 123
        %v958 = vpop.permute.xlu0 %957
        %959 = vrot.lane.b32.xlu0 %v377, 123
        %v960 = vpop.permute.xlu0 %959
        %v966 = vsel %vm399, %v949, 0
        %v969 = vsel %vm399, %v950, 0
        %v972 = vsel %vm399, %v951, 0
        %v975 = vsel %vm399, %v952, 0
        %977 = vmatprep.subr.mxu0 0.0
        %978 = vmatpush1.msra.mxu0 %v954
        %979 = vmatprep.subr.mxu0 0.0
        %980 = vmatpush1.msra.mxu0 %v956
        %981 = vmatprep.subr.mxu0 0.0
        %982 = vmatpush1.msra.mxu0 %v958
        %983 = vmatprep.subr.mxu0 0.0
        %984 = vmatpush1.msra.mxu0 %v960
        %985 = vmatprep.subr.mxu0 0.0
        %986 = vmatpush1.msra.mxu0 0.0
        %987 = vmatprep.subr.mxu0 0.0
        %988 = vmatpush1.msra.mxu0 0.0
        %989 = vmatprep.subr.mxu0 0.0
        %990 = vmatpush1.msra.mxu0 0.0
        %991 = vmatprep.subr.mxu0 0.0
        %992 = vmatpush1.msra.mxu0 0.0
        %993 = vmatprep.subr.mxu0 0.0
        %994 = vmatpush1.msra.mxu0 0.0
        %995 = vmatprep.subr.mxu0 0.0
        %996 = vmatpush1.msra.mxu0 0.0
        %997 = vmatprep.subr.mxu0 0.0
        %998 = vmatpush1.msra.mxu0 0.0
        %999 = vmatprep.subr.mxu0 0.0
        %1000 = vmatpush1.msra.mxu0 0.0
        %1001 = vmatprep.subr.mxu0 0.0
        %1002 = vmatpush1.msra.mxu0 0.0
        %1003 = vmatprep.subr.mxu0 0.0
        %1004 = vmatpush1.msra.mxu0 0.0
        %1005 = vmatprep.subr.mxu0 0.0
        %1006 = vmatpush1.msra.mxu0 0.0
        %1007 = vmatprep.subr.mxu0 0.0
        %1008 = vmatpush1.msra.mxu0 0.0
        %1009 = vmatprep.subr.mxu0 0.0
        %1010 = vmatpush1.msra.mxu0 0.0
        %1011 = vmatprep.subr.mxu0 0.0
        %1012 = vmatpush1.msra.mxu0 0.0
        %1013 = vmatprep.subr.mxu0 0.0
        %1014 = vmatpush1.msra.mxu0 0.0
        %1015 = vmatprep.subr.mxu0 0.0
        %1016 = vmatpush1.msra.mxu0 0.0
        %1017 = vmatprep.subr.mxu0 0.0
        %1018 = vmatpush1.msra.mxu0 0.0
        %1019 = vmatprep.subr.mxu0 0.0
        %1020 = vmatpush1.msra.mxu0 0.0
        %1021 = vmatprep.subr.mxu0 0.0
        %1022 = vmatpush1.msra.mxu0 0.0
        %1023 = vmatprep.subr.mxu0 0.0
        %1024 = vmatpush1.msra.mxu0 0.0
        %1025 = vmatprep.subr.mxu0 0.0
        %1026 = vmatpush1.msra.mxu0 0.0
        %1027 = vmatprep.subr.mxu0 0.0
        %1028 = vmatpush1.msra.mxu0 0.0
        %1029 = vmatprep.subr.mxu0 0.0
        %1030 = vmatpush1.msra.mxu0 0.0
        %1031 = vmatprep.subr.mxu0 0.0
        %1032 = vmatpush1.msra.mxu0 0.0
        %1033 = vmatprep.subr.mxu0 0.0
        %1034 = vmatpush1.msra.mxu0 0.0
        %1035 = vmatprep.subr.mxu0 0.0
        %1036 = vmatpush1.msra.mxu0 0.0
        %1037 = vmatprep.subr.mxu0 0.0
        %1038 = vmatpush1.msra.mxu0 0.0
        %1039 = vmatprep.subr.mxu0 0.0
        %1040 = vmatpush1.msra.mxu0 0.0
        %1041 = vmatprep.mubr.f32.mxu0 0.0
        %1042 = vmatmul.mubr.f32.gmra.mrb[0].mxu0 %v966
        %v1043 = vpop.f32.mrb[0].mxu0
        %v1044 = vadd.f32 0.0, %v1043
        %v1045 = vpop.f32.mrb[0].mxu0
        %1046 = vmatprep.mubr.f32.mxu0 0.0
        %1047 = vmatmul.mubr.f32.gmra.mrb[0].mxu0 %v969
        %v1048 = vpop.f32.mrb[0].mxu0
        %v1049 = vadd.f32 0.0, %v1048
        %v1050 = vpop.f32.mrb[0].mxu0
        %1051 = vmatprep.mubr.f32.mxu0 0.0
        %1052 = vmatmul.mubr.f32.gmra.mrb[0].mxu0 %v972
        %v1053 = vpop.f32.mrb[0].mxu0
        %v1054 = vadd.f32 0.0, %v1053
        %v1055 = vpop.f32.mrb[0].mxu0
        %1056 = vmatprep.mubr.f32.mxu0 0.0
        %1057 = vmatmul.mubr.f32.gmra.mrb[0].mxu0 %v975
        %v1058 = vpop.f32.mrb[0].mxu0
        %v1059 = vadd.f32 0.0, %v1058
        %v1060 = vpop.f32.mrb[0].mxu0
        %1061 = vdwg.mxu0
        %v1062 = vadd.f32 %v944, %v1044
        %v1063 = vadd.f32 %v945, %v1049
        %v1064 = vadd.f32 %v946, %v1054
        %v1065 = vadd.f32 %v947, %v1059
        %s1066 = scalar_lea.vmem [#allocation3], 192
        %v1067 = vld [vmem:[%s1066] sm:$0xff]
        %v1068 = vld [vmem:[%s1066 + $0x8] sm:$0xff]
        %v1069 = vld [vmem:[%s1066 + $0x10] sm:$0xff]
        %v1070 = vld [vmem:[%s1066 + $0x18] sm:$0xff]
        %1071 = vrot.lane.b32.xlu0 %v374, 122
        %v1072 = vpop.permute.xlu0 %1071
        %1073 = vrot.lane.b32.xlu0 %v375, 122
        %v1074 = vpop.permute.xlu0 %1073
        %1075 = vrot.lane.b32.xlu0 %v376, 122
        %v1076 = vpop.permute.xlu0 %1075
        %1077 = vrot.lane.b32.xlu0 %v377, 122
        %v1078 = vpop.permute.xlu0 %1077
        %v1084 = vsel %vm399, %v1067, 0
        %v1087 = vsel %vm399, %v1068, 0
        %v1090 = vsel %vm399, %v1069, 0
        %v1093 = vsel %vm399, %v1070, 0
        %1095 = vmatprep.subr.mxu0 0.0
        %1096 = vmatpush1.msra.mxu0 %v1072
        %1097 = vmatprep.subr.mxu0 0.0
        %1098 = vmatpush1.msra.mxu0 %v1074
        %1099 = vmatprep.subr.mxu0 0.0
        %1100 = vmatpush1.msra.mxu0 %v1076
        %1101 = vmatprep.subr.mxu0 0.0
        %1102 = vmatpush1.msra.mxu0 %v1078
        %1103 = vmatprep.subr.mxu0 0.0
        %1104 = vmatpush1.msra.mxu0 0.0
        %1105 = vmatprep.subr.mxu0 0.0
        %1106 = vmatpush1.msra.mxu0 0.0
        %1107 = vmatprep.subr.mxu0 0.0
        %1108 = vmatpush1.msra.mxu0 0.0
        %1109 = vmatprep.subr.mxu0 0.0
        %1110 = vmatpush1.msra.mxu0 0.0
        %1111 = vmatprep.subr.mxu0 0.0
        %1112 = vmatpush1.msra.mxu0 0.0
        %1113 = vmatprep.subr.mxu0 0.0
        %1114 = vmatpush1.msra.mxu0 0.0
        %1115 = vmatprep.subr.mxu0 0.0
        %1116 = vmatpush1.msra.mxu0 0.0
        %1117 = vmatprep.subr.mxu0 0.0
        %1118 = vmatpush1.msra.mxu0 0.0
        %1119 = vmatprep.subr.mxu0 0.0
        %1120 = vmatpush1.msra.mxu0 0.0
        %1121 = vmatprep.subr.mxu0 0.0
        %1122 = vmatpush1.msra.mxu0 0.0
        %1123 = vmatprep.subr.mxu0 0.0
        %1124 = vmatpush1.msra.mxu0 0.0
        %1125 = vmatprep.subr.mxu0 0.0
        %1126 = vmatpush1.msra.mxu0 0.0
        %1127 = vmatprep.subr.mxu0 0.0
        %1128 = vmatpush1.msra.mxu0 0.0
        %1129 = vmatprep.subr.mxu0 0.0
        %1130 = vmatpush1.msra.mxu0 0.0
        %1131 = vmatprep.subr.mxu0 0.0
        %1132 = vmatpush1.msra.mxu0 0.0
        %1133 = vmatprep.subr.mxu0 0.0
        %1134 = vmatpush1.msra.mxu0 0.0
        %1135 = vmatprep.subr.mxu0 0.0
        %1136 = vmatpush1.msra.mxu0 0.0
        %1137 = vmatprep.subr.mxu0 0.0
        %1138 = vmatpush1.msra.mxu0 0.0
        %1139 = vmatprep.subr.mxu0 0.0
        %1140 = vmatpush1.msra.mxu0 0.0
        %1141 = vmatprep.subr.mxu0 0.0
        %1142 = vmatpush1.msra.mxu0 0.0
        %1143 = vmatprep.subr.mxu0 0.0
        %1144 = vmatpush1.msra.mxu0 0.0
        %1145 = vmatprep.subr.mxu0 0.0
        %1146 = vmatpush1.msra.mxu0 0.0
        %1147 = vmatprep.subr.mxu0 0.0
        %1148 = vmatpush1.msra.mxu0 0.0
        %1149 = vmatprep.subr.mxu0 0.0
        %1150 = vmatpush1.msra.mxu0 0.0
        %1151 = vmatprep.subr.mxu0 0.0
        %1152 = vmatpush1.msra.mxu0 0.0
        %1153 = vmatprep.subr.mxu0 0.0
        %1154 = vmatpush1.msra.mxu0 0.0
        %1155 = vmatprep.subr.mxu0 0.0
        %1156 = vmatpush1.msra.mxu0 0.0
        %1157 = vmatprep.subr.mxu0 0.0
        %1158 = vmatpush1.msra.mxu0 0.0
        %1159 = vmatprep.mubr.f32.mxu0 0.0
        %1160 = vmatmul.mubr.f32.gmra.mrb[0].mxu0 %v1084
        %v1161 = vpop.f32.mrb[0].mxu0
        %v1162 = vadd.f32 0.0, %v1161
        %v1163 = vpop.f32.mrb[0].mxu0
        %1164 = vmatprep.mubr.f32.mxu0 0.0
        %1165 = vmatmul.mubr.f32.gmra.mrb[0].mxu0 %v1087
        %v1166 = vpop.f32.mrb[0].mxu0
        %v1167 = vadd.f32 0.0, %v1166
        %v1168 = vpop.f32.mrb[0].mxu0
        %1169 = vmatprep.mubr.f32.mxu0 0.0
        %1170 = vmatmul.mubr.f32.gmra.mrb[0].mxu0 %v1090
        %v1171 = vpop.f32.mrb[0].mxu0
        %v1172 = vadd.f32 0.0, %v1171
        %v1173 = vpop.f32.mrb[0].mxu0
        %1174 = vmatprep.mubr.f32.mxu0 0.0
        %1175 = vmatmul.mubr.f32.gmra.mrb[0].mxu0 %v1093
        %v1176 = vpop.f32.mrb[0].mxu0
        %v1177 = vadd.f32 0.0, %v1176
        %v1178 = vpop.f32.mrb[0].mxu0
        %1179 = vdwg.mxu0
        %v1180 = vadd.f32 %v1062, %v1162
        %v1181 = vadd.f32 %v1063, %v1167
        %v1182 = vadd.f32 %v1064, %v1172
        %v1183 = vadd.f32 %v1065, %v1177
        %s1184 = scalar_lea.vmem [#allocation3], 224
        %v1185 = vld [vmem:[%s1184] sm:$0xff]
        %v1186 = vld [vmem:[%s1184 + $0x8] sm:$0xff]
        %v1187 = vld [vmem:[%s1184 + $0x10] sm:$0xff]
        %v1188 = vld [vmem:[%s1184 + $0x18] sm:$0xff]
        %1189 = vrot.lane.b32.xlu0 %v374, 121
        %v1190 = vpop.permute.xlu0 %1189
        %1191 = vrot.lane.b32.xlu0 %v375, 121
        %v1192 = vpop.permute.xlu0 %1191
        %1193 = vrot.lane.b32.xlu0 %v376, 121
        %v1194 = vpop.permute.xlu0 %1193
        %1195 = vrot.lane.b32.xlu0 %v377, 121
        %v1196 = vpop.permute.xlu0 %1195
        %v1202 = vsel %vm399, %v1185, 0
        %v1205 = vsel %vm399, %v1186, 0
        %v1208 = vsel %vm399, %v1187, 0
        %v1211 = vsel %vm399, %v1188, 0
        %1213 = vmatprep.subr.mxu0 0.0
        %1214 = vmatpush1.msra.mxu0 %v1190
        %1215 = vmatprep.subr.mxu0 0.0
        %1216 = vmatpush1.msra.mxu0 %v1192
        %1217 = vmatprep.subr.mxu0 0.0
        %1218 = vmatpush1.msra.mxu0 %v1194
        %1219 = vmatprep.subr.mxu0 0.0
        %1220 = vmatpush1.msra.mxu0 %v1196
        %1221 = vmatprep.subr.mxu0 0.0
        %1222 = vmatpush1.msra.mxu0 0.0
        %1223 = vmatprep.subr.mxu0 0.0
        %1224 = vmatpush1.msra.mxu0 0.0
        %1225 = vmatprep.subr.mxu0 0.0
        %1226 = vmatpush1.msra.mxu0 0.0
        %1227 = vmatprep.subr.mxu0 0.0
        %1228 = vmatpush1.msra.mxu0 0.0
        %1229 = vmatprep.subr.mxu0 0.0
        %1230 = vmatpush1.msra.mxu0 0.0
        %1231 = vmatprep.subr.mxu0 0.0
        %1232 = vmatpush1.msra.mxu0 0.0
        %1233 = vmatprep.subr.mxu0 0.0
        %1234 = vmatpush1.msra.mxu0 0.0
        %1235 = vmatprep.subr.mxu0 0.0
        %1236 = vmatpush1.msra.mxu0 0.0
        %1237 = vmatprep.subr.mxu0 0.0
        %1238 = vmatpush1.msra.mxu0 0.0
        %1239 = vmatprep.subr.mxu0 0.0
        %1240 = vmatpush1.msra.mxu0 0.0
        %1241 = vmatprep.subr.mxu0 0.0
        %1242 = vmatpush1.msra.mxu0 0.0
        %1243 = vmatprep.subr.mxu0 0.0
        %1244 = vmatpush1.msra.mxu0 0.0
        %1245 = vmatprep.subr.mxu0 0.0
        %1246 = vmatpush1.msra.mxu0 0.0
        %1247 = vmatprep.subr.mxu0 0.0
        %1248 = vmatpush1.msra.mxu0 0.0
        %1249 = vmatprep.subr.mxu0 0.0
        %1250 = vmatpush1.msra.mxu0 0.0
        %1251 = vmatprep.subr.mxu0 0.0
        %1252 = vmatpush1.msra.mxu0 0.0
        %1253 = vmatprep.subr.mxu0 0.0
        %1254 = vmatpush1.msra.mxu0 0.0
        %1255 = vmatprep.subr.mxu0 0.0
        %1256 = vmatpush1.msra.mxu0 0.0
        %1257 = vmatprep.subr.mxu0 0.0
        %1258 = vmatpush1.msra.mxu0 0.0
        %1259 = vmatprep.subr.mxu0 0.0
        %1260 = vmatpush1.msra.mxu0 0.0
        %1261 = vmatprep.subr.mxu0 0.0
        %1262 = vmatpush1.msra.mxu0 0.0
        %1263 = vmatprep.subr.mxu0 0.0
        %1264 = vmatpush1.msra.mxu0 0.0
        %1265 = vmatprep.subr.mxu0 0.0
        %1266 = vmatpush1.msra.mxu0 0.0
        %1267 = vmatprep.subr.mxu0 0.0
        %1268 = vmatpush1.msra.mxu0 0.0
        %1269 = vmatprep.subr.mxu0 0.0
        %1270 = vmatpush1.msra.mxu0 0.0
        %1271 = vmatprep.subr.mxu0 0.0
        %1272 = vmatpush1.msra.mxu0 0.0
        %1273 = vmatprep.subr.mxu0 0.0
        %1274 = vmatpush1.msra.mxu0 0.0
        %1275 = vmatprep.subr.mxu0 0.0
        %1276 = vmatpush1.msra.mxu0 0.0
        %1277 = vmatprep.mubr.f32.mxu0 0.0
        %1278 = vmatmul.mubr.f32.gmra.mrb[0].mxu0 %v1202
        %v1279 = vpop.f32.mrb[0].mxu0
        %v1280 = vadd.f32 0.0, %v1279
        %v1281 = vpop.f32.mrb[0].mxu0
        %1282 = vmatprep.mubr.f32.mxu0 0.0
        %1283 = vmatmul.mubr.f32.gmra.mrb[0].mxu0 %v1205
        %v1284 = vpop.f32.mrb[0].mxu0
        %v1285 = vadd.f32 0.0, %v1284
        %v1286 = vpop.f32.mrb[0].mxu0
        %1287 = vmatprep.mubr.f32.mxu0 0.0
        %1288 = vmatmul.mubr.f32.gmra.mrb[0].mxu0 %v1208
        %v1289 = vpop.f32.mrb[0].mxu0
        %v1290 = vadd.f32 0.0, %v1289
        %v1291 = vpop.f32.mrb[0].mxu0
        %1292 = vmatprep.mubr.f32.mxu0 0.0
        %1293 = vmatmul.mubr.f32.gmra.mrb[0].mxu0 %v1211
        %v1294 = vpop.f32.mrb[0].mxu0
        %v1295 = vadd.f32 0.0, %v1294
        %v1296 = vpop.f32.mrb[0].mxu0
        %1297 = vdwg.mxu0
        %v1298 = vadd.f32 %v1180, %v1280
        %v1299 = vadd.f32 %v1181, %v1285
        %v1300 = vadd.f32 %v1182, %v1290
        %v1301 = vadd.f32 %v1183, %v1295
        %s1302 = scalar_lea.vmem [#allocation3], 256
        %v1303 = vld [vmem:[%s1302] sm:$0xff]
        %v1304 = vld [vmem:[%s1302 + $0x8] sm:$0xff]
        %v1305 = vld [vmem:[%s1302 + $0x10] sm:$0xff]
        %v1306 = vld [vmem:[%s1302 + $0x18] sm:$0xff]
        %1307 = vrot.lane.b32.xlu0 %v374, 120
        %v1308 = vpop.permute.xlu0 %1307
        %1309 = vrot.lane.b32.xlu0 %v375, 120
        %v1310 = vpop.permute.xlu0 %1309
        %1311 = vrot.lane.b32.xlu0 %v376, 120
        %v1312 = vpop.permute.xlu0 %1311
        %1313 = vrot.lane.b32.xlu0 %v377, 120
        %v1314 = vpop.permute.xlu0 %1313
        %v1320 = vsel %vm399, %v1303, 0
        %v1323 = vsel %vm399, %v1304, 0
        %v1326 = vsel %vm399, %v1305, 0
        %v1329 = vsel %vm399, %v1306, 0
        %1331 = vmatprep.subr.mxu0 0.0
        %1332 = vmatpush1.msra.mxu0 %v1308
        %1333 = vmatprep.subr.mxu0 0.0
        %1334 = vmatpush1.msra.mxu0 %v1310
        %1335 = vmatprep.subr.mxu0 0.0
        %1336 = vmatpush1.msra.mxu0 %v1312
        %1337 = vmatprep.subr.mxu0 0.0
        %1338 = vmatpush1.msra.mxu0 %v1314
        %1339 = vmatprep.subr.mxu0 0.0
        %1340 = vmatpush1.msra.mxu0 0.0
        %1341 = vmatprep.subr.mxu0 0.0
        %1342 = vmatpush1.msra.mxu0 0.0
        %1343 = vmatprep.subr.mxu0 0.0
        %1344 = vmatpush1.msra.mxu0 0.0
        %1345 = vmatprep.subr.mxu0 0.0
        %1346 = vmatpush1.msra.mxu0 0.0
        %1347 = vmatprep.subr.mxu0 0.0
        %1348 = vmatpush1.msra.mxu0 0.0
        %1349 = vmatprep.subr.mxu0 0.0
        %1350 = vmatpush1.msra.mxu0 0.0
        %1351 = vmatprep.subr.mxu0 0.0
        %1352 = vmatpush1.msra.mxu0 0.0
        %1353 = vmatprep.subr.mxu0 0.0
        %1354 = vmatpush1.msra.mxu0 0.0
        %1355 = vmatprep.subr.mxu0 0.0
        %1356 = vmatpush1.msra.mxu0 0.0
        %1357 = vmatprep.subr.mxu0 0.0
        %1358 = vmatpush1.msra.mxu0 0.0
        %1359 = vmatprep.subr.mxu0 0.0
        %1360 = vmatpush1.msra.mxu0 0.0
        %1361 = vmatprep.subr.mxu0 0.0
        %1362 = vmatpush1.msra.mxu0 0.0
        %1363 = vmatprep.subr.mxu0 0.0
        %1364 = vmatpush1.msra.mxu0 0.0
        %1365 = vmatprep.subr.mxu0 0.0
        %1366 = vmatpush1.msra.mxu0 0.0
        %1367 = vmatprep.subr.mxu0 0.0
        %1368 = vmatpush1.msra.mxu0 0.0
        %1369 = vmatprep.subr.mxu0 0.0
        %1370 = vmatpush1.msra.mxu0 0.0
        %1371 = vmatprep.subr.mxu0 0.0
        %1372 = vmatpush1.msra.mxu0 0.0
        %1373 = vmatprep.subr.mxu0 0.0
        %1374 = vmatpush1.msra.mxu0 0.0
        %1375 = vmatprep.subr.mxu0 0.0
        %1376 = vmatpush1.msra.mxu0 0.0
        %1377 = vmatprep.subr.mxu0 0.0
        %1378 = vmatpush1.msra.mxu0 0.0
        %1379 = vmatprep.subr.mxu0 0.0
        %1380 = vmatpush1.msra.mxu0 0.0
        %1381 = vmatprep.subr.mxu0 0.0
        %1382 = vmatpush1.msra.mxu0 0.0
        %1383 = vmatprep.subr.mxu0 0.0
        %1384 = vmatpush1.msra.mxu0 0.0
        %1385 = vmatprep.subr.mxu0 0.0
        %1386 = vmatpush1.msra.mxu0 0.0
        %1387 = vmatprep.subr.mxu0 0.0
        %1388 = vmatpush1.msra.mxu0 0.0
        %1389 = vmatprep.subr.mxu0 0.0
        %1390 = vmatpush1.msra.mxu0 0.0
        %1391 = vmatprep.subr.mxu0 0.0
        %1392 = vmatpush1.msra.mxu0 0.0
        %1393 = vmatprep.subr.mxu0 0.0
        %1394 = vmatpush1.msra.mxu0 0.0
        %1395 = vmatprep.mubr.f32.mxu0 0.0
        %1396 = vmatmul.mubr.f32.gmra.mrb[0].mxu0 %v1320
        %v1397 = vpop.f32.mrb[0].mxu0
        %v1398 = vadd.f32 0.0, %v1397
        %v1399 = vpop.f32.mrb[0].mxu0
        %1400 = vmatprep.mubr.f32.mxu0 0.0
        %1401 = vmatmul.mubr.f32.gmra.mrb[0].mxu0 %v1323
        %v1402 = vpop.f32.mrb[0].mxu0
        %v1403 = vadd.f32 0.0, %v1402
        %v1404 = vpop.f32.mrb[0].mxu0
        %1405 = vmatprep.mubr.f32.mxu0 0.0
        %1406 = vmatmul.mubr.f32.gmra.mrb[0].mxu0 %v1326
        %v1407 = vpop.f32.mrb[0].mxu0
        %v1408 = vadd.f32 0.0, %v1407
        %v1409 = vpop.f32.mrb[0].mxu0
        %1410 = vmatprep.mubr.f32.mxu0 0.0
        %1411 = vmatmul.mubr.f32.gmra.mrb[0].mxu0 %v1329
        %v1412 = vpop.f32.mrb[0].mxu0
        %v1413 = vadd.f32 0.0, %v1412
        %v1414 = vpop.f32.mrb[0].mxu0
        %1415 = vdwg.mxu0
        %v1416 = vadd.f32 %v1298, %v1398
        %v1417 = vadd.f32 %v1299, %v1403
        %v1418 = vadd.f32 %v1300, %v1408
        %v1419 = vadd.f32 %v1301, %v1413
        %v1420 = vld [vmem:[%s2] sm:$0xff]
        %v1421 = vld [vmem:[%s2 + $0x8] sm:$0xff]
        %v1422 = vld [vmem:[%s2 + $0x10] sm:$0xff]
        %v1423 = vld [vmem:[%s2 + $0x18] sm:$0xff]
        %1425 = vset.pattern.permute.xlu0 0
        %1426 = vperm.xlu0 %1425, %v1420
        %v1427 = vpop.permute.xlu0 %1426
        %1430 = vset.pattern.permute.xlu0 0
        %1431 = vperm.xlu0 %1430, %v1421
        %v1432 = vpop.permute.xlu0 %1431
        %1435 = vset.pattern.permute.xlu0 0
        %1436 = vperm.xlu0 %1435, %v1422
        %v1437 = vpop.permute.xlu0 %1436
        %1440 = vset.pattern.permute.xlu0 0
        %1441 = vperm.xlu0 %1440, %v1423
        %v1442 = vpop.permute.xlu0 %1441
        %v1444 = vadd.f32 %v1416, %v1427
        %v1445 = vadd.f32 %v1417, %v1432
        %v1446 = vadd.f32 %v1418, %v1437
        %v1447 = vadd.f32 %v1419, %v1442
        %v1448 = vmul.f32 %v1444, 0.5
        %v1449 = vmul.f32 %v1445, 0.5
        %v1450 = vmul.f32 %v1446, 0.5
        %v1451 = vmul.f32 %v1447, 0.5
        %v1452 = vmul.f32 %v1444, 0.70710677
        %v1453 = vmul.f32 %v1445, 0.70710677
        %v1454 = vmul.f32 %v1446, 0.70710677
        %v1455 = vmul.f32 %v1447, 0.70710677
        %v1456 = vand.u32 2147483647, %v1452
        %v1457 = vand.u32 2147483647, %v1453
        %v1458 = vand.u32 2147483647, %v1454
        %v1459 = vand.u32 2147483647, %v1455
        %v1460 = vmul.f32 %v1456, 0.3275911
        %v1461 = vmul.f32 %v1457, 0.3275911
        %v1462 = vmul.f32 %v1458, 0.3275911
        %v1463 = vmul.f32 %v1459, 0.3275911
        %v1464 = vadd.f32 %v1460, 1.0
        %v1465 = vadd.f32 %v1461, 1.0
        %v1466 = vadd.f32 %v1462, 1.0
        %v1467 = vadd.f32 %v1463, 1.0
        %v1468 = vrcp.pop %v1464
        %v1469 = vmul.f32 1.0, %v1468
        %v1470 = vrcp.pop %v1465
        %v1471 = vmul.f32 1.0, %v1470
        %v1472 = vrcp.pop %v1466
        %v1473 = vmul.f32 1.0, %v1472
        %v1474 = vrcp.pop %v1467
        %v1475 = vmul.f32 1.0, %v1474
        %v1476 = vmul.f32 %v1469, 1.0614054
        %v1477 = vmul.f32 %v1471, 1.0614054
        %v1478 = vmul.f32 %v1473, 1.0614054
        %v1479 = vmul.f32 %v1475, 1.0614054
        %v1480 = vadd.f32 %v1476, -1.4531521
        %v1481 = vadd.f32 %v1477, -1.4531521
        %v1482 = vadd.f32 %v1478, -1.4531521
        %v1483 = vadd.f32 %v1479, -1.4531521
        %v1484 = vmul.f32 %v1480, %v1469
        %v1485 = vmul.f32 %v1481, %v1471
        %v1486 = vmul.f32 %v1482, %v1473
        %v1487 = vmul.f32 %v1483, %v1475
        %v1488 = vadd.f32 %v1484, 1.4214138
        %v1489 = vadd.f32 %v1485, 1.4214138
        %v1490 = vadd.f32 %v1486, 1.4214138
        %v1491 = vadd.f32 %v1487, 1.4214138
        %v1492 = vmul.f32 %v1488, %v1469
        %v1493 = vmul.f32 %v1489, %v1471
        %v1494 = vmul.f32 %v1490, %v1473
        %v1495 = vmul.f32 %v1491, %v1475
        %v1496 = vadd.f32 %v1492, -0.28449672
        %v1497 = vadd.f32 %v1493, -0.28449672
        %v1498 = vadd.f32 %v1494, -0.28449672
        %v1499 = vadd.f32 %v1495, -0.28449672
        %v1500 = vmul.f32 %v1496, %v1469
        %v1501 = vmul.f32 %v1497, %v1471
        %v1502 = vmul.f32 %v1498, %v1473
        %v1503 = vmul.f32 %v1499, %v1475
        %v1504 = vadd.f32 %v1500, 0.2548296
        %v1505 = vadd.f32 %v1501, 0.2548296
        %v1506 = vadd.f32 %v1502, 0.2548296
        %v1507 = vadd.f32 %v1503, 0.2548296
        %v1508 = vmul.f32 %v1504, %v1469
        %v1509 = vmul.f32 %v1505, %v1471
        %v1510 = vmul.f32 %v1506, %v1473
        %v1511 = vmul.f32 %v1507, %v1475
        %v1512 = vsub.f32 0.0, %v1456
        %v1513 = vsub.f32 0.0, %v1457
        %v1514 = vsub.f32 0.0, %v1458
        %v1515 = vsub.f32 0.0, %v1459
        %v1516 = vmul.f32 %v1512, %v1456
        %v1517 = vmul.f32 %v1513, %v1457
        %v1518 = vmul.f32 %v1514, %v1458
        %v1519 = vmul.f32 %v1515, %v1459
        %v1520 = vmul.f32 %v1516, 1.442695
        %v1521 = vpow.pop %v1520
        %v1522 = vmul.f32 %v1517, 1.442695
        %v1523 = vpow.pop %v1522
        %v1524 = vmul.f32 %v1518, 1.442695
        %v1525 = vpow.pop %v1524
        %v1526 = vmul.f32 %v1519, 1.442695
        %v1527 = vpow.pop %v1526
        %v1528 = vmul.f32 %v1508, %v1521
        %v1529 = vmul.f32 %v1509, %v1523
        %v1530 = vmul.f32 %v1510, %v1525
        %v1531 = vmul.f32 %v1511, %v1527
        %v1532 = vsub.f32 1.0, %v1528
        %v1533 = vsub.f32 1.0, %v1529
        %v1534 = vsub.f32 1.0, %v1530
        %v1535 = vsub.f32 1.0, %v1531
        %vm1536 = vcmp.ge.f32.partialorder %v1452, 0.0
        %vm1537 = vcmp.ge.f32.partialorder %v1453, 0.0
        %vm1538 = vcmp.ge.f32.partialorder %v1454, 0.0
        %vm1539 = vcmp.ge.f32.partialorder %v1455, 0.0
        %v1540 = vsub.f32 0.0, %v1532
        %v1541 = vsub.f32 0.0, %v1533
        %v1542 = vsub.f32 0.0, %v1534
        %v1543 = vsub.f32 0.0, %v1535
        %v1544 = vsel %vm1536, %v1532, %v1540
        %v1545 = vsel %vm1537, %v1533, %v1541
        %v1546 = vsel %vm1538, %v1534, %v1542
        %v1547 = vsel %vm1539, %v1535, %v1543
        %v1548 = vadd.f32 %v1544, 1.0
        %v1549 = vadd.f32 %v1545, 1.0
        %v1550 = vadd.f32 %v1546, 1.0
        %v1551 = vadd.f32 %v1547, 1.0
        %v1552 = vmul.f32 %v1448, %v1548
        %v1553 = vmul.f32 %v1449, %v1549
        %v1554 = vmul.f32 %v1450, %v1550
        %v1555 = vmul.f32 %v1451, %v1551
        %v1556 = vadd.f32 %v240, %v1552
        %v1557 = vadd.f32 %v241, %v1553
        %v1558 = vadd.f32 %v242, %v1554
        %v1559 = vadd.f32 %v243, %v1555
        %1560 = vst.msk [vmem:[%s239] sm:$0xff] %vm244, %v1556
        %1561 = vst.msk [vmem:[%s239 + $0x8] sm:$0xff] %vm244, %v1557
        %1562 = vst.msk [vmem:[%s239 + $0x10] sm:$0xff] %vm244, %v1558
        %1563 = vst.msk [vmem:[%s239 + $0x18] sm:$0xff] %vm244, %v1559
        %p1564 = scmp.lt.s32.totalorder %s17, 1
        %s1565 = scalar_select %p1564, %s17, 1
        %s1566 = smul.addr %s1565, 4
        %s1567 = smul.addr %s1566, 8
        %s1568 = scalar_lea.vmem %s5, %s1567
        // Predicated region
        $region45: #{tpu_custom_call.1} parent=39 // pred_check
          %p1569 = pneg %p145
        $region46: #{tpu_custom_call.1} parent=39 // pred_check_branch
          %1571 = sbr.rel (%p1569) target = $region48
        $region47: #{tpu_custom_call.1} parent=39 // pred_region
          _
        $region48: #{tpu_custom_call.1} parent=39 // pred_fallthru
          _
      $region40: #{tpu_custom_call.1} parent=5 // pred_fallthru
        _
      %p1572 = scmp.le.s32.totalorder 2, %s12
      // Predicated region
      $region49: #{tpu_custom_call.1} parent=5 // pred_check
        %p1573 = pneg %p1572
      $region50: #{tpu_custom_call.1} parent=5 // pred_check_branch
        %1575 = sbr.rel (%p1573) target = $region52
      $region51: #{tpu_custom_call.1} parent=5 // pred_region
        %s1576 = ssub.s32 %s12, 2
        // Predicated region
        $region53: #{tpu_custom_call.1} parent=51 // pred_check
          %p1577 = pneg %p151
        $region54: #{tpu_custom_call.1} parent=51 // pred_check_branch
          %1579 = sbr.rel (%p1577) target = $region56
        $region55: #{tpu_custom_call.1} parent=51 // pred_region
          %p1580 = scmp.lt.s32.totalorder %s18, 1
          %s1581 = scalar_select %p1580, %s18, 1
          %s1582 = smul.addr %s1581, 4
          %s1583 = smul.addr %s1582, 8
          %s1584 = scalar_lea.vmem %s5, %s1583
        $region56: #{tpu_custom_call.1} parent=51 // pred_fallthru
          _
      $region52: #{tpu_custom_call.1} parent=5 // pred_fallthru
        _
    $region6: #{tpu_custom_call.1} parent=1 // loop_footer
      %s16 = sadd.s32 1, %s12
    $region7: #{tpu_custom_call.1} parent=1 // loop_footer_branch
      %11 = sbr.rel target = $region3
    $region8: #{tpu_custom_call.1} parent=1 // loop_exit
      _
    %1585 = vsyncpa [#allocation4], 1
    %s1586 = scalar_lea.sflag [#allocation4], 1
    %1587 = vsyncpa %s1586, 1

</llo_original>
